<compile_context>
chip_gen: v5e
topology: v5e:2x2
jax: 0.10.0
libtpu: 0.0.40
codegen_flags: <defaults>
</compile_context>

<pallas_src>
import jax
import jax.numpy as jnp
from jax.experimental import pallas as pl
from jax.experimental.pallas import tpu as pltpu


# ----------------------------- Pallas kernel ------------------------------- #
def _make_fused_lstm_kernel(B, T, D, H, L):
    """Kernel running L stacked LSTM layers over a (B, T, D) input in one pallas_call."""

    def kernel(*refs):
        # refs = [x, (w_ih_t, w_hh_t, bias) * L, out]
        x_ref = refs[0]
        w_refs = refs[1:1 + 3 * L]
        out_ref = refs[1 + 3 * L]

        # ---------------- hoisted, loop-invariant prep (runs once) ----------------
        w_ih = [w_refs[3 * l + 0][...] for l in range(L)]       # (D or H, 4H)
        w_hh = [w_refs[3 * l + 1][...] for l in range(L)]       # (H, 4H)
        # Layer-0 bias is folded into the hoisted input projection below; layers >= 1
        # get a pre-broadcast (B, 4H) bias so nothing re-materializes per unrolled step.
        bias = [None] + [jnp.broadcast_to(w_refs[3 * l + 2][...], (B, 4 * H))
                         for l in range(1, L)]

        # Hoisted layer-0 input projection for ALL time steps: one MXU push.
        # (B,T,D) -> (B*T, D) is an aligned, contiguous sublane merge.
        x_flat = x_ref[...].reshape(B * T, D)
        xw0 = (jnp.dot(x_flat, w_ih[0], preferred_element_type=jnp.float32)
               + w_refs[2][...]).reshape(B, T, 4 * H)           # (B, T, 4H)

        def cell(g, c_prev):
            i = jax.nn.sigmoid(g[:, 0 * H:1 * H])
            f = jax.nn.sigmoid(g[:, 1 * H:2 * H])
            gg = jnp.tanh(g[:, 2 * H:3 * H])
            o = jax.nn.sigmoid(g[:, 3 * H:4 * H])
            c = f * c_prev + i * gg
            h = o * jnp.tanh(c)
            return h, c

        zeros = jnp.zeros((B, H), jnp.float32)
        h = [zeros] * L                       # carries stay in registers (values)
        c = [zeros] * L

        # ---------------- wavefront recurrence (fully unrolled) -------------------
        # Wave w runs layer l at step t = w - l.  Every layer in a wave reads only
        # previous-wave state (h_snap), so the per-wave MXU pushes are independent.
        for w in range(T + L - 1):
            h_snap = list(h)
            for l in range(L):
                t = w - l
                if not (0 <= t < T):
                    continue
                if l == 0:
                    gx = xw0[:, t, :]                                        # precomputed
                else:
                    # Off-chain push: depends only on the layer below's previous-wave h.
                    gx = jnp.dot(h_snap[l - 1], w_ih[l],
                                 preferred_element_type=jnp.float32) + bias[l]
                # The only push on layer l's serial h->h chain:
                g = gx + jnp.dot(h_snap[l], w_hh[l],
                                 preferred_element_type=jnp.float32)          # (B, 4H)
                h[l], c[l] = cell(g, c[l])
                if l == L - 1:
                    # Lane-slice store into the lane-dense (B, T*H) output slab.
                    out_ref[:, t * H:(t + 1) * H] = h[l].astype(out_ref.dtype)

    return kernel


# ------------------------------ forward pass ------------------------------- #
def temporal_converge_lstm_forward(x_btd, params):
    """x_btd: (B, T, input_dim) -> (B, T, hidden_dim), matching nn.LSTM(batch_first=True)."""
    B, T, D = x_btd.shape
    L = len(params)
    H = params[0]["w_hh_t"].shape[0]

    kernel = _make_fused_lstm_kernel(B, T, D, H, L)

    args = [x_btd]
    for p in params:
        args += [p["w_ih_t"], p["w_hh_t"], p["bias"]]

    vmem = pl.BlockSpec(memory_space=pltpu.MemorySpace.VMEM)
    out_flat = pl.pallas_call(
        kernel,
        out_shape=jax.ShapeDtypeStruct((B, T * H), jnp.float32),  # lane-dense slab
        in_specs=[vmem] * len(args),
        out_specs=vmem,
    )(*args)

    # Contiguous (B, T*H) -> (B, T, H): metadata-only reshape (no transpose, no HBM pass).
    return out_flat.reshape(B, T, H)


# ------------------------- parameter initialization ------------------------ #
def _xavier_uniform(key, shape):
    fan_out, fan_in = shape
    bound = (6.0 / (fan_in + fan_out)) ** 0.5
    return jax.random.uniform(key, shape, jnp.float32, -bound, bound)


def _orthogonal(key, shape):
    rows, cols = shape
    flat = jax.random.normal(key, (max(rows, cols), min(rows, cols)), jnp.float32)
    q, r = jnp.linalg.qr(flat)
    q = q * jnp.sign(jnp.diag(r))[None, :]
    if rows < cols:
        q = q.T
    return q[:rows, :cols]


def init_temporal_converge_lstm(key, input_dim, hidden_dim, num_layers):
    """Deterministic analogue of TemporalConverge._init_weights for the LSTM branch."""
    params = []
    for layer in range(num_layers):
        d_in = input_dim if layer == 0 else hidden_dim
        key, k1, k2 = jax.random.split(key, 3)
        w_ih = _xavier_uniform(k1, (4 * hidden_dim, d_in))     # xavier_uniform_
        w_hh = _orthogonal(k2, (4 * hidden_dim, hidden_dim))   # orthogonal_
        b = jnp.zeros((1, 4 * hidden_dim), jnp.float32)        # b_ih + b_hh = 0
        params.append({"w_ih_t": w_ih.T, "w_hh_t": w_hh.T, "bias": b})
    return params


# ------------------------- pure-JAX reference check ------------------------ #
def _lstm_ref(x_btd, params):
    x = x_btd
    B = x.shape[0]
    for p in params:
        H = p["w_hh_t"].shape[0]
        w_ih_t, w_hh_t, b = p["w_ih_t"], p["w_hh_t"], p["bias"]

        def step(carry, x_t):
            h, c = carry
            g = x_t @ w_ih_t + h @ w_hh_t + b
            i = jax.nn.sigmoid(g[:, 0 * H:1 * H])
            f = jax.nn.sigmoid(g[:, 1 * H:2 * H])
            gg = jnp.tanh(g[:, 2 * H:3 * H])
            o = jax.nn.sigmoid(g[:, 3 * H:4 * H])
            c = f * c + i * gg
            h = o * jnp.tanh(c)
            return (h, c), h

        h0 = jnp.zeros((B, H), jnp.float32)
        c0 = jnp.zeros((B, H), jnp.float32)
        _, ys = jax.lax.scan(step, (h0, c0), jnp.transpose(x, (1, 0, 2)))
        x = jnp.transpose(ys, (1, 0, 2))
    return x


# ----------------------------------- main ----------------------------------- #
if __name__ == "__main__":
    # config = {'time_model': 'LSTM', 'input_dim': 32, 'hidden_dim': 32, 'l_num_layers': 2}
    B, T, INPUT_DIM, HIDDEN_DIM, NUM_LAYERS = 2, 8, 32, 32, 2

    key = jax.random.PRNGKey(0)
    k_x, k_p = jax.random.split(key)
    x = jax.random.normal(k_x, (B, T, INPUT_DIM), jnp.float32)
    params = init_temporal_converge_lstm(k_p, INPUT_DIM, HIDDEN_DIM, NUM_LAYERS)

    fwd = jax.jit(temporal_converge_lstm_forward)
    out = jax.block_until_ready(fwd(x, params))
    assert out.shape == (B, T, HIDDEN_DIM), out.shape

    ref = _lstm_ref(x, params)
    assert jnp.allclose(out, ref, atol=1e-4, rtol=1e-4), float(jnp.max(jnp.abs(out - ref)))

    print("KERNEL_OK")
</pallas_src>

<mosaic_0001>
module attributes {stable_mosaic.version = 11 : i64} {
  func.func @kernel(%arg0: memref<2x8x32xf32, #tpu.memory_space<vmem>>, %arg1: memref<32x128xf32, #tpu.memory_space<vmem>>, %arg2: memref<32x128xf32, #tpu.memory_space<vmem>>, %arg3: memref<1x128xf32, #tpu.memory_space<vmem>>, %arg4: memref<32x128xf32, #tpu.memory_space<vmem>>, %arg5: memref<32x128xf32, #tpu.memory_space<vmem>>, %arg6: memref<1x128xf32, #tpu.memory_space<vmem>>, %arg7: memref<2x256xf32, #tpu.memory_space<vmem>>) attributes {dimension_semantics = [], scalar_prefetch = 0 : i64, scratch_operands = 0 : i64, tpu.core_type = #tpu.core_type<tc>} {
    %c0 = arith.constant 0 : index
    %c0_0 = arith.constant 0 : index
    %0 = vector.load %arg1[%c0, %c0_0] : memref<32x128xf32, #tpu.memory_space<vmem>>, vector<32x128xf32>
    %c0_1 = arith.constant 0 : index
    %c0_2 = arith.constant 0 : index
    %1 = vector.load %arg4[%c0_1, %c0_2] : memref<32x128xf32, #tpu.memory_space<vmem>>, vector<32x128xf32>
    %c0_3 = arith.constant 0 : index
    %c0_4 = arith.constant 0 : index
    %2 = vector.load %arg2[%c0_3, %c0_4] : memref<32x128xf32, #tpu.memory_space<vmem>>, vector<32x128xf32>
    %c0_5 = arith.constant 0 : index
    %c0_6 = arith.constant 0 : index
    %3 = vector.load %arg5[%c0_5, %c0_6] : memref<32x128xf32, #tpu.memory_space<vmem>>, vector<32x128xf32>
    %c0_7 = arith.constant 0 : index
    %c0_8 = arith.constant 0 : index
    %4 = vector.load %arg6[%c0_7, %c0_8] : memref<1x128xf32, #tpu.memory_space<vmem>>, vector<1x128xf32>
    %5 = vector.shape_cast %4 : vector<1x128xf32> to vector<1x128xf32>
    %6 = vector.broadcast %5 : vector<1x128xf32> to vector<2x128xf32>
    %c0_9 = arith.constant 0 : index
    %c0_10 = arith.constant 0 : index
    %c0_11 = arith.constant 0 : index
    %7 = vector.load %arg0[%c0_9, %c0_10, %c0_11] : memref<2x8x32xf32, #tpu.memory_space<vmem>>, vector<2x8x32xf32>
    %8 = vector.shape_cast %7 : vector<2x8x32xf32> to vector<16x32xf32>
    %cst = arith.constant dense<0.000000e+00> : vector<16x128xf32>
    %9 = tpu.matmul %8, %0, %cst {dimension_numbers = #tpu.dot_dimension_numbers<[1], [0], [0], [1], [0, 0, 1, 1], [], []>} : vector<16x32xf32>, vector<32x128xf32>, vector<16x128xf32> -> vector<16x128xf32>
    %c0_12 = arith.constant 0 : index
    %c0_13 = arith.constant 0 : index
    %10 = vector.load %arg3[%c0_12, %c0_13] : memref<1x128xf32, #tpu.memory_space<vmem>>, vector<1x128xf32>
    %11 = vector.broadcast %10 : vector<1x128xf32> to vector<16x128xf32>
    %12 = arith.addf %9, %11 : vector<16x128xf32>
    %13 = vector.shape_cast %12 : vector<16x128xf32> to vector<2x8x128xf32>
    %cst_14 = arith.constant 0.000000e+00 : f32
    %14 = vector.broadcast %cst_14 : f32 to vector<2x32xf32>
    %15 = vector.extract_strided_slice %13 {offsets = [0, 0, 0], sizes = [2, 1, 128], strides = [1, 1, 1]} : vector<2x8x128xf32> to vector<2x1x128xf32>
    %16 = vector.shape_cast %15 : vector<2x1x128xf32> to vector<2x128xf32>
    %cst_15 = arith.constant dense<0.000000e+00> : vector<2x128xf32>
    %17 = tpu.matmul %14, %2, %cst_15 {dimension_numbers = #tpu.dot_dimension_numbers<[1], [0], [0], [1], [0, 0, 1, 1], [], []>} : vector<2x32xf32>, vector<32x128xf32>, vector<2x128xf32> -> vector<2x128xf32>
    %18 = arith.addf %16, %17 : vector<2x128xf32>
    %19 = vector.extract_strided_slice %18 {offsets = [0, 0], sizes = [2, 32], strides = [1, 1]} : vector<2x128xf32> to vector<2x32xf32>
    %20 = arith.negf %19 : vector<2x32xf32>
    %21 = math.exp %20 : vector<2x32xf32>
    %cst_16 = arith.constant 1.000000e+00 : f32
    %22 = vector.broadcast %cst_16 : f32 to vector<2x32xf32>
    %23 = arith.addf %22, %21 : vector<2x32xf32>
    %24 = arith.divf %22, %23 : vector<2x32xf32>
    %25 = vector.extract_strided_slice %18 {offsets = [0, 32], sizes = [2, 32], strides = [1, 1]} : vector<2x128xf32> to vector<2x32xf32>
    %26 = arith.negf %25 : vector<2x32xf32>
    %27 = math.exp %26 : vector<2x32xf32>
    %cst_17 = arith.constant 1.000000e+00 : f32
    %28 = vector.broadcast %cst_17 : f32 to vector<2x32xf32>
    %29 = arith.addf %28, %27 : vector<2x32xf32>
    %30 = arith.divf %28, %29 : vector<2x32xf32>
    %31 = vector.extract_strided_slice %18 {offsets = [0, 64], sizes = [2, 32], strides = [1, 1]} : vector<2x128xf32> to vector<2x32xf32>
    %32 = math.tanh %31 : vector<2x32xf32>
    %33 = vector.extract_strided_slice %18 {offsets = [0, 96], sizes = [2, 32], strides = [1, 1]} : vector<2x128xf32> to vector<2x32xf32>
    %34 = arith.negf %33 : vector<2x32xf32>
    %35 = math.exp %34 : vector<2x32xf32>
    %cst_18 = arith.constant 1.000000e+00 : f32
    %36 = vector.broadcast %cst_18 : f32 to vector<2x32xf32>
    %37 = arith.addf %36, %35 : vector<2x32xf32>
    %38 = arith.divf %36, %37 : vector<2x32xf32>
    %39 = arith.mulf %30, %14 : vector<2x32xf32>
    %40 = arith.mulf %24, %32 : vector<2x32xf32>
    %41 = arith.addf %39, %40 : vector<2x32xf32>
    %42 = math.tanh %41 : vector<2x32xf32>
    %43 = arith.mulf %38, %42 : vector<2x32xf32>
    %44 = vector.extract_strided_slice %13 {offsets = [0, 1, 0], sizes = [2, 1, 128], strides = [1, 1, 1]} : vector<2x8x128xf32> to vector<2x1x128xf32>
    %45 = vector.shape_cast %44 : vector<2x1x128xf32> to vector<2x128xf32>
    %cst_19 = arith.constant dense<0.000000e+00> : vector<2x128xf32>
    %46 = tpu.matmul %43, %2, %cst_19 {dimension_numbers = #tpu.dot_dimension_numbers<[1], [0], [0], [1], [0, 0, 1, 1], [], []>} : vector<2x32xf32>, vector<32x128xf32>, vector<2x128xf32> -> vector<2x128xf32>
    %47 = arith.addf %45, %46 : vector<2x128xf32>
    %48 = vector.extract_strided_slice %47 {offsets = [0, 0], sizes = [2, 32], strides = [1, 1]} : vector<2x128xf32> to vector<2x32xf32>
    %49 = arith.negf %48 : vector<2x32xf32>
    %50 = math.exp %49 : vector<2x32xf32>
    %cst_20 = arith.constant 1.000000e+00 : f32
    %51 = vector.broadcast %cst_20 : f32 to vector<2x32xf32>
    %52 = arith.addf %51, %50 : vector<2x32xf32>
    %53 = arith.divf %51, %52 : vector<2x32xf32>
    %54 = vector.extract_strided_slice %47 {offsets = [0, 32], sizes = [2, 32], strides = [1, 1]} : vector<2x128xf32> to vector<2x32xf32>
    %55 = arith.negf %54 : vector<2x32xf32>
    %56 = math.exp %55 : vector<2x32xf32>
    %cst_21 = arith.constant 1.000000e+00 : f32
    %57 = vector.broadcast %cst_21 : f32 to vector<2x32xf32>
    %58 = arith.addf %57, %56 : vector<2x32xf32>
    %59 = arith.divf %57, %58 : vector<2x32xf32>
    %60 = vector.extract_strided_slice %47 {offsets = [0, 64], sizes = [2, 32], strides = [1, 1]} : vector<2x128xf32> to vector<2x32xf32>
    %61 = math.tanh %60 : vector<2x32xf32>
    %62 = vector.extract_strided_slice %47 {offsets = [0, 96], sizes = [2, 32], strides = [1, 1]} : vector<2x128xf32> to vector<2x32xf32>
    %63 = arith.negf %62 : vector<2x32xf32>
    %64 = math.exp %63 : vector<2x32xf32>
    %cst_22 = arith.constant 1.000000e+00 : f32
    %65 = vector.broadcast %cst_22 : f32 to vector<2x32xf32>
    %66 = arith.addf %65, %64 : vector<2x32xf32>
    %67 = arith.divf %65, %66 : vector<2x32xf32>
    %68 = arith.mulf %59, %41 : vector<2x32xf32>
    %69 = arith.mulf %53, %61 : vector<2x32xf32>
    %70 = arith.addf %68, %69 : vector<2x32xf32>
    %71 = math.tanh %70 : vector<2x32xf32>
    %72 = arith.mulf %67, %71 : vector<2x32xf32>
    %cst_23 = arith.constant dense<0.000000e+00> : vector<2x128xf32>
    %73 = tpu.matmul %43, %1, %cst_23 {dimension_numbers = #tpu.dot_dimension_numbers<[1], [0], [0], [1], [0, 0, 1, 1], [], []>} : vector<2x32xf32>, vector<32x128xf32>, vector<2x128xf32> -> vector<2x128xf32>
    %74 = arith.addf %73, %6 : vector<2x128xf32>
    %cst_24 = arith.constant dense<0.000000e+00> : vector<2x128xf32>
    %75 = tpu.matmul %14, %3, %cst_24 {dimension_numbers = #tpu.dot_dimension_numbers<[1], [0], [0], [1], [0, 0, 1, 1], [], []>} : vector<2x32xf32>, vector<32x128xf32>, vector<2x128xf32> -> vector<2x128xf32>
    %76 = arith.addf %74, %75 : vector<2x128xf32>
    %77 = vector.extract_strided_slice %76 {offsets = [0, 0], sizes = [2, 32], strides = [1, 1]} : vector<2x128xf32> to vector<2x32xf32>
    %78 = arith.negf %77 : vector<2x32xf32>
    %79 = math.exp %78 : vector<2x32xf32>
    %cst_25 = arith.constant 1.000000e+00 : f32
    %80 = vector.broadcast %cst_25 : f32 to vector<2x32xf32>
    %81 = arith.addf %80, %79 : vector<2x32xf32>
    %82 = arith.divf %80, %81 : vector<2x32xf32>
    %83 = vector.extract_strided_slice %76 {offsets = [0, 32], sizes = [2, 32], strides = [1, 1]} : vector<2x128xf32> to vector<2x32xf32>
    %84 = arith.negf %83 : vector<2x32xf32>
    %85 = math.exp %84 : vector<2x32xf32>
    %cst_26 = arith.constant 1.000000e+00 : f32
    %86 = vector.broadcast %cst_26 : f32 to vector<2x32xf32>
    %87 = arith.addf %86, %85 : vector<2x32xf32>
    %88 = arith.divf %86, %87 : vector<2x32xf32>
    %89 = vector.extract_strided_slice %76 {offsets = [0, 64], sizes = [2, 32], strides = [1, 1]} : vector<2x128xf32> to vector<2x32xf32>
    %90 = math.tanh %89 : vector<2x32xf32>
    %91 = vector.extract_strided_slice %76 {offsets = [0, 96], sizes = [2, 32], strides = [1, 1]} : vector<2x128xf32> to vector<2x32xf32>
    %92 = arith.negf %91 : vector<2x32xf32>
    %93 = math.exp %92 : vector<2x32xf32>
    %cst_27 = arith.constant 1.000000e+00 : f32
    %94 = vector.broadcast %cst_27 : f32 to vector<2x32xf32>
    %95 = arith.addf %94, %93 : vector<2x32xf32>
    %96 = arith.divf %94, %95 : vector<2x32xf32>
    %97 = arith.mulf %88, %14 : vector<2x32xf32>
    %98 = arith.mulf %82, %90 : vector<2x32xf32>
    %99 = arith.addf %97, %98 : vector<2x32xf32>
    %100 = math.tanh %99 : vector<2x32xf32>
    %101 = arith.mulf %96, %100 : vector<2x32xf32>
    %c0_28 = arith.constant 0 : index
    %c0_29 = arith.constant 0 : index
    %102 = vector.load %arg7[%c0_28, %c0_29] : memref<2x256xf32, #tpu.memory_space<vmem>>, vector<2x32xf32>
    tpu.vector_store %arg7[%c0_28, %c0_29], %101 {strides = array<i32>} : memref<2x256xf32, #tpu.memory_space<vmem>>, vector<2x32xf32>,
    %103 = vector.extract_strided_slice %13 {offsets = [0, 2, 0], sizes = [2, 1, 128], strides = [1, 1, 1]} : vector<2x8x128xf32> to vector<2x1x128xf32>
    %104 = vector.shape_cast %103 : vector<2x1x128xf32> to vector<2x128xf32>
    %cst_30 = arith.constant dense<0.000000e+00> : vector<2x128xf32>
    %105 = tpu.matmul %72, %2, %cst_30 {dimension_numbers = #tpu.dot_dimension_numbers<[1], [0], [0], [1], [0, 0, 1, 1], [], []>} : vector<2x32xf32>, vector<32x128xf32>, vector<2x128xf32> -> vector<2x128xf32>
    %106 = arith.addf %104, %105 : vector<2x128xf32>
    %107 = vector.extract_strided_slice %106 {offsets = [0, 0], sizes = [2, 32], strides = [1, 1]} : vector<2x128xf32> to vector<2x32xf32>
    %108 = arith.negf %107 : vector<2x32xf32>
    %109 = math.exp %108 : vector<2x32xf32>
    %cst_31 = arith.constant 1.000000e+00 : f32
    %110 = vector.broadcast %cst_31 : f32 to vector<2x32xf32>
    %111 = arith.addf %110, %109 : vector<2x32xf32>
    %112 = arith.divf %110, %111 : vector<2x32xf32>
    %113 = vector.extract_strided_slice %106 {offsets = [0, 32], sizes = [2, 32], strides = [1, 1]} : vector<2x128xf32> to vector<2x32xf32>
    %114 = arith.negf %113 : vector<2x32xf32>
    %115 = math.exp %114 : vector<2x32xf32>
    %cst_32 = arith.constant 1.000000e+00 : f32
    %116 = vector.broadcast %cst_32 : f32 to vector<2x32xf32>
    %117 = arith.addf %116, %115 : vector<2x32xf32>
    %118 = arith.divf %116, %117 : vector<2x32xf32>
    %119 = vector.extract_strided_slice %106 {offsets = [0, 64], sizes = [2, 32], strides = [1, 1]} : vector<2x128xf32> to vector<2x32xf32>
    %120 = math.tanh %119 : vector<2x32xf32>
    %121 = vector.extract_strided_slice %106 {offsets = [0, 96], sizes = [2, 32], strides = [1, 1]} : vector<2x128xf32> to vector<2x32xf32>
    %122 = arith.negf %121 : vector<2x32xf32>
    %123 = math.exp %122 : vector<2x32xf32>
    %cst_33 = arith.constant 1.000000e+00 : f32
    %124 = vector.broadcast %cst_33 : f32 to vector<2x32xf32>
    %125 = arith.addf %124, %123 : vector<2x32xf32>
    %126 = arith.divf %124, %125 : vector<2x32xf32>
    %127 = arith.mulf %118, %70 : vector<2x32xf32>
    %128 = arith.mulf %112, %120 : vector<2x32xf32>
    %129 = arith.addf %127, %128 : vector<2x32xf32>
    %130 = math.tanh %129 : vector<2x32xf32>
    %131 = arith.mulf %126, %130 : vector<2x32xf32>
    %cst_34 = arith.constant dense<0.000000e+00> : vector<2x128xf32>
    %132 = tpu.matmul %72, %1, %cst_34 {dimension_numbers = #tpu.dot_dimension_numbers<[1], [0], [0], [1], [0, 0, 1, 1], [], []>} : vector<2x32xf32>, vector<32x128xf32>, vector<2x128xf32> -> vector<2x128xf32>
    %133 = arith.addf %132, %6 : vector<2x128xf32>
    %cst_35 = arith.constant dense<0.000000e+00> : vector<2x128xf32>
    %134 = tpu.matmul %101, %3, %cst_35 {dimension_numbers = #tpu.dot_dimension_numbers<[1], [0], [0], [1], [0, 0, 1, 1], [], []>} : vector<2x32xf32>, vector<32x128xf32>, vector<2x128xf32> -> vector<2x128xf32>
    %135 = arith.addf %133, %134 : vector<2x128xf32>
    %136 = vector.extract_strided_slice %135 {offsets = [0, 0], sizes = [2, 32], strides = [1, 1]} : vector<2x128xf32> to vector<2x32xf32>
    %137 = arith.negf %136 : vector<2x32xf32>
    %138 = math.exp %137 : vector<2x32xf32>
    %cst_36 = arith.constant 1.000000e+00 : f32
    %139 = vector.broadcast %cst_36 : f32 to vector<2x32xf32>
    %140 = arith.addf %139, %138 : vector<2x32xf32>
    %141 = arith.divf %139, %140 : vector<2x32xf32>
    %142 = vector.extract_strided_slice %135 {offsets = [0, 32], sizes = [2, 32], strides = [1, 1]} : vector<2x128xf32> to vector<2x32xf32>
    %143 = arith.negf %142 : vector<2x32xf32>
    %144 = math.exp %143 : vector<2x32xf32>
    %cst_37 = arith.constant 1.000000e+00 : f32
    %145 = vector.broadcast %cst_37 : f32 to vector<2x32xf32>
    %146 = arith.addf %145, %144 : vector<2x32xf32>
    %147 = arith.divf %145, %146 : vector<2x32xf32>
    %148 = vector.extract_strided_slice %135 {offsets = [0, 64], sizes = [2, 32], strides = [1, 1]} : vector<2x128xf32> to vector<2x32xf32>
    %149 = math.tanh %148 : vector<2x32xf32>
    %150 = vector.extract_strided_slice %135 {offsets = [0, 96], sizes = [2, 32], strides = [1, 1]} : vector<2x128xf32> to vector<2x32xf32>
    %151 = arith.negf %150 : vector<2x32xf32>
    %152 = math.exp %151 : vector<2x32xf32>
    %cst_38 = arith.constant 1.000000e+00 : f32
    %153 = vector.broadcast %cst_38 : f32 to vector<2x32xf32>
    %154 = arith.addf %153, %152 : vector<2x32xf32>
    %155 = arith.divf %153, %154 : vector<2x32xf32>
    %156 = arith.mulf %147, %99 : vector<2x32xf32>
    %157 = arith.mulf %141, %149 : vector<2x32xf32>
    %158 = arith.addf %156, %157 : vector<2x32xf32>
    %159 = math.tanh %158 : vector<2x32xf32>
    %160 = arith.mulf %155, %159 : vector<2x32xf32>
    %c0_39 = arith.constant 0 : index
    %c32 = arith.constant 32 : index
    %161 = vector.load %arg7[%c0_39, %c32] : memref<2x256xf32, #tpu.memory_space<vmem>>, vector<2x32xf32>
    tpu.vector_store %arg7[%c0_39, %c32], %160 {strides = array<i32>} : memref<2x256xf32, #tpu.memory_space<vmem>>, vector<2x32xf32>,
    %162 = vector.extract_strided_slice %13 {offsets = [0, 3, 0], sizes = [2, 1, 128], strides = [1, 1, 1]} : vector<2x8x128xf32> to vector<2x1x128xf32>
    %163 = vector.shape_cast %162 : vector<2x1x128xf32> to vector<2x128xf32>
    %cst_40 = arith.constant dense<0.000000e+00> : vector<2x128xf32>
    %164 = tpu.matmul %131, %2, %cst_40 {dimension_numbers = #tpu.dot_dimension_numbers<[1], [0], [0], [1], [0, 0, 1, 1], [], []>} : vector<2x32xf32>, vector<32x128xf32>, vector<2x128xf32> -> vector<2x128xf32>
    %165 = arith.addf %163, %164 : vector<2x128xf32>
    %166 = vector.extract_strided_slice %165 {offsets = [0, 0], sizes = [2, 32], strides = [1, 1]} : vector<2x128xf32> to vector<2x32xf32>
    %167 = arith.negf %166 : vector<2x32xf32>
    %168 = math.exp %167 : vector<2x32xf32>
    %cst_41 = arith.constant 1.000000e+00 : f32
    %169 = vector.broadcast %cst_41 : f32 to vector<2x32xf32>
    %170 = arith.addf %169, %168 : vector<2x32xf32>
    %171 = arith.divf %169, %170 : vector<2x32xf32>
    %172 = vector.extract_strided_slice %165 {offsets = [0, 32], sizes = [2, 32], strides = [1, 1]} : vector<2x128xf32> to vector<2x32xf32>
    %173 = arith.negf %172 : vector<2x32xf32>
    %174 = math.exp %173 : vector<2x32xf32>
    %cst_42 = arith.constant 1.000000e+00 : f32
    %175 = vector.broadcast %cst_42 : f32 to vector<2x32xf32>
    %176 = arith.addf %175, %174 : vector<2x32xf32>
    %177 = arith.divf %175, %176 : vector<2x32xf32>
    %178 = vector.extract_strided_slice %165 {offsets = [0, 64], sizes = [2, 32], strides = [1, 1]} : vector<2x128xf32> to vector<2x32xf32>
    %179 = math.tanh %178 : vector<2x32xf32>
    %180 = vector.extract_strided_slice %165 {offsets = [0, 96], sizes = [2, 32], strides = [1, 1]} : vector<2x128xf32> to vector<2x32xf32>
    %181 = arith.negf %180 : vector<2x32xf32>
    %182 = math.exp %181 : vector<2x32xf32>
    %cst_43 = arith.constant 1.000000e+00 : f32
    %183 = vector.broadcast %cst_43 : f32 to vector<2x32xf32>
    %184 = arith.addf %183, %182 : vector<2x32xf32>
    %185 = arith.divf %183, %184 : vector<2x32xf32>
    %186 = arith.mulf %177, %129 : vector<2x32xf32>
    %187 = arith.mulf %171, %179 : vector<2x32xf32>
    %188 = arith.addf %186, %187 : vector<2x32xf32>
    %189 = math.tanh %188 : vector<2x32xf32>
    %190 = arith.mulf %185, %189 : vector<2x32xf32>
    %cst_44 = arith.constant dense<0.000000e+00> : vector<2x128xf32>
    %191 = tpu.matmul %131, %1, %cst_44 {dimension_numbers = #tpu.dot_dimension_numbers<[1], [0], [0], [1], [0, 0, 1, 1], [], []>} : vector<2x32xf32>, vector<32x128xf32>, vector<2x128xf32> -> vector<2x128xf32>
    %192 = arith.addf %191, %6 : vector<2x128xf32>
    %cst_45 = arith.constant dense<0.000000e+00> : vector<2x128xf32>
    %193 = tpu.matmul %160, %3, %cst_45 {dimension_numbers = #tpu.dot_dimension_numbers<[1], [0], [0], [1], [0, 0, 1, 1], [], []>} : vector<2x32xf32>, vector<32x128xf32>, vector<2x128xf32> -> vector<2x128xf32>
    %194 = arith.addf %192, %193 : vector<2x128xf32>
    %195 = vector.extract_strided_slice %194 {offsets = [0, 0], sizes = [2, 32], strides = [1, 1]} : vector<2x128xf32> to vector<2x32xf32>
    %196 = arith.negf %195 : vector<2x32xf32>
    %197 = math.exp %196 : vector<2x32xf32>
    %cst_46 = arith.constant 1.000000e+00 : f32
    %198 = vector.broadcast %cst_46 : f32 to vector<2x32xf32>
    %199 = arith.addf %198, %197 : vector<2x32xf32>
    %200 = arith.divf %198, %199 : vector<2x32xf32>
    %201 = vector.extract_strided_slice %194 {offsets = [0, 32], sizes = [2, 32], strides = [1, 1]} : vector<2x128xf32> to vector<2x32xf32>
    %202 = arith.negf %201 : vector<2x32xf32>
    %203 = math.exp %202 : vector<2x32xf32>
    %cst_47 = arith.constant 1.000000e+00 : f32
    %204 = vector.broadcast %cst_47 : f32 to vector<2x32xf32>
    %205 = arith.addf %204, %203 : vector<2x32xf32>
    %206 = arith.divf %204, %205 : vector<2x32xf32>
    %207 = vector.extract_strided_slice %194 {offsets = [0, 64], sizes = [2, 32], strides = [1, 1]} : vector<2x128xf32> to vector<2x32xf32>
    %208 = math.tanh %207 : vector<2x32xf32>
    %209 = vector.extract_strided_slice %194 {offsets = [0, 96], sizes = [2, 32], strides = [1, 1]} : vector<2x128xf32> to vector<2x32xf32>
    %210 = arith.negf %209 : vector<2x32xf32>
    %211 = math.exp %210 : vector<2x32xf32>
    %cst_48 = arith.constant 1.000000e+00 : f32
    %212 = vector.broadcast %cst_48 : f32 to vector<2x32xf32>
    %213 = arith.addf %212, %211 : vector<2x32xf32>
    %214 = arith.divf %212, %213 : vector<2x32xf32>
    %215 = arith.mulf %206, %158 : vector<2x32xf32>
    %216 = arith.mulf %200, %208 : vector<2x32xf32>
    %217 = arith.addf %215, %216 : vector<2x32xf32>
    %218 = math.tanh %217 : vector<2x32xf32>
    %219 = arith.mulf %214, %218 : vector<2x32xf32>
    %c0_49 = arith.constant 0 : index
    %c64 = arith.constant 64 : index
    %220 = vector.load %arg7[%c0_49, %c64] : memref<2x256xf32, #tpu.memory_space<vmem>>, vector<2x32xf32>
    tpu.vector_store %arg7[%c0_49, %c64], %219 {strides = array<i32>} : memref<2x256xf32, #tpu.memory_space<vmem>>, vector<2x32xf32>,
    %221 = vector.extract_strided_slice %13 {offsets = [0, 4, 0], sizes = [2, 1, 128], strides = [1, 1, 1]} : vector<2x8x128xf32> to vector<2x1x128xf32>
    %222 = vector.shape_cast %221 : vector<2x1x128xf32> to vector<2x128xf32>
    %cst_50 = arith.constant dense<0.000000e+00> : vector<2x128xf32>
    %223 = tpu.matmul %190, %2, %cst_50 {dimension_numbers = #tpu.dot_dimension_numbers<[1], [0], [0], [1], [0, 0, 1, 1], [], []>} : vector<2x32xf32>, vector<32x128xf32>, vector<2x128xf32> -> vector<2x128xf32>
    %224 = arith.addf %222, %223 : vector<2x128xf32>
    %225 = vector.extract_strided_slice %224 {offsets = [0, 0], sizes = [2, 32], strides = [1, 1]} : vector<2x128xf32> to vector<2x32xf32>
    %226 = arith.negf %225 : vector<2x32xf32>
    %227 = math.exp %226 : vector<2x32xf32>
    %cst_51 = arith.constant 1.000000e+00 : f32
    %228 = vector.broadcast %cst_51 : f32 to vector<2x32xf32>
    %229 = arith.addf %228, %227 : vector<2x32xf32>
    %230 = arith.divf %228, %229 : vector<2x32xf32>
    %231 = vector.extract_strided_slice %224 {offsets = [0, 32], sizes = [2, 32], strides = [1, 1]} : vector<2x128xf32> to vector<2x32xf32>
    %232 = arith.negf %231 : vector<2x32xf32>
    %233 = math.exp %232 : vector<2x32xf32>
    %cst_52 = arith.constant 1.000000e+00 : f32
    %234 = vector.broadcast %cst_52 : f32 to vector<2x32xf32>
    %235 = arith.addf %234, %233 : vector<2x32xf32>
    %236 = arith.divf %234, %235 : vector<2x32xf32>
    %237 = vector.extract_strided_slice %224 {offsets = [0, 64], sizes = [2, 32], strides = [1, 1]} : vector<2x128xf32> to vector<2x32xf32>
    %238 = math.tanh %237 : vector<2x32xf32>
    %239 = vector.extract_strided_slice %224 {offsets = [0, 96], sizes = [2, 32], strides = [1, 1]} : vector<2x128xf32> to vector<2x32xf32>
    %240 = arith.negf %239 : vector<2x32xf32>
    %241 = math.exp %240 : vector<2x32xf32>
    %cst_53 = arith.constant 1.000000e+00 : f32
    %242 = vector.broadcast %cst_53 : f32 to vector<2x32xf32>
    %243 = arith.addf %242, %241 : vector<2x32xf32>
    %244 = arith.divf %242, %243 : vector<2x32xf32>
    %245 = arith.mulf %236, %188 : vector<2x32xf32>
    %246 = arith.mulf %230, %238 : vector<2x32xf32>
    %247 = arith.addf %245, %246 : vector<2x32xf32>
    %248 = math.tanh %247 : vector<2x32xf32>
    %249 = arith.mulf %244, %248 : vector<2x32xf32>
    %cst_54 = arith.constant dense<0.000000e+00> : vector<2x128xf32>
    %250 = tpu.matmul %190, %1, %cst_54 {dimension_numbers = #tpu.dot_dimension_numbers<[1], [0], [0], [1], [0, 0, 1, 1], [], []>} : vector<2x32xf32>, vector<32x128xf32>, vector<2x128xf32> -> vector<2x128xf32>
    %251 = arith.addf %250, %6 : vector<2x128xf32>
    %cst_55 = arith.constant dense<0.000000e+00> : vector<2x128xf32>
    %252 = tpu.matmul %219, %3, %cst_55 {dimension_numbers = #tpu.dot_dimension_numbers<[1], [0], [0], [1], [0, 0, 1, 1], [], []>} : vector<2x32xf32>, vector<32x128xf32>, vector<2x128xf32> -> vector<2x128xf32>
    %253 = arith.addf %251, %252 : vector<2x128xf32>
    %254 = vector.extract_strided_slice %253 {offsets = [0, 0], sizes = [2, 32], strides = [1, 1]} : vector<2x128xf32> to vector<2x32xf32>
    %255 = arith.negf %254 : vector<2x32xf32>
    %256 = math.exp %255 : vector<2x32xf32>
    %cst_56 = arith.constant 1.000000e+00 : f32
    %257 = vector.broadcast %cst_56 : f32 to vector<2x32xf32>
    %258 = arith.addf %257, %256 : vector<2x32xf32>
    %259 = arith.divf %257, %258 : vector<2x32xf32>
    %260 = vector.extract_strided_slice %253 {offsets = [0, 32], sizes = [2, 32], strides = [1, 1]} : vector<2x128xf32> to vector<2x32xf32>
    %261 = arith.negf %260 : vector<2x32xf32>
    %262 = math.exp %261 : vector<2x32xf32>
    %cst_57 = arith.constant 1.000000e+00 : f32
    %263 = vector.broadcast %cst_57 : f32 to vector<2x32xf32>
    %264 = arith.addf %263, %262 : vector<2x32xf32>
    %265 = arith.divf %263, %264 : vector<2x32xf32>
    %266 = vector.extract_strided_slice %253 {offsets = [0, 64], sizes = [2, 32], strides = [1, 1]} : vector<2x128xf32> to vector<2x32xf32>
    %267 = math.tanh %266 : vector<2x32xf32>
    %268 = vector.extract_strided_slice %253 {offsets = [0, 96], sizes = [2, 32], strides = [1, 1]} : vector<2x128xf32> to vector<2x32xf32>
    %269 = arith.negf %268 : vector<2x32xf32>
    %270 = math.exp %269 : vector<2x32xf32>
    %cst_58 = arith.constant 1.000000e+00 : f32
    %271 = vector.broadcast %cst_58 : f32 to vector<2x32xf32>
    %272 = arith.addf %271, %270 : vector<2x32xf32>
    %273 = arith.divf %271, %272 : vector<2x32xf32>
    %274 = arith.mulf %265, %217 : vector<2x32xf32>
    %275 = arith.mulf %259, %267 : vector<2x32xf32>
    %276 = arith.addf %274, %275 : vector<2x32xf32>
    %277 = math.tanh %276 : vector<2x32xf32>
    %278 = arith.mulf %273, %277 : vector<2x32xf32>
    %c0_59 = arith.constant 0 : index
    %c96 = arith.constant 96 : index
    %279 = vector.load %arg7[%c0_59, %c96] : memref<2x256xf32, #tpu.memory_space<vmem>>, vector<2x32xf32>
    tpu.vector_store %arg7[%c0_59, %c96], %278 {strides = array<i32>} : memref<2x256xf32, #tpu.memory_space<vmem>>, vector<2x32xf32>,
    %280 = vector.extract_strided_slice %13 {offsets = [0, 5, 0], sizes = [2, 1, 128], strides = [1, 1, 1]} : vector<2x8x128xf32> to vector<2x1x128xf32>
    %281 = vector.shape_cast %280 : vector<2x1x128xf32> to vector<2x128xf32>
    %cst_60 = arith.constant dense<0.000000e+00> : vector<2x128xf32>
    %282 = tpu.matmul %249, %2, %cst_60 {dimension_numbers = #tpu.dot_dimension_numbers<[1], [0], [0], [1], [0, 0, 1, 1], [], []>} : vector<2x32xf32>, vector<32x128xf32>, vector<2x128xf32> -> vector<2x128xf32>
    %283 = arith.addf %281, %282 : vector<2x128xf32>
    %284 = vector.extract_strided_slice %283 {offsets = [0, 0], sizes = [2, 32], strides = [1, 1]} : vector<2x128xf32> to vector<2x32xf32>
    %285 = arith.negf %284 : vector<2x32xf32>
    %286 = math.exp %285 : vector<2x32xf32>
    %cst_61 = arith.constant 1.000000e+00 : f32
    %287 = vector.broadcast %cst_61 : f32 to vector<2x32xf32>
    %288 = arith.addf %287, %286 : vector<2x32xf32>
    %289 = arith.divf %287, %288 : vector<2x32xf32>
    %290 = vector.extract_strided_slice %283 {offsets = [0, 32], sizes = [2, 32], strides = [1, 1]} : vector<2x128xf32> to vector<2x32xf32>
    %291 = arith.negf %290 : vector<2x32xf32>
    %292 = math.exp %291 : vector<2x32xf32>
    %cst_62 = arith.constant 1.000000e+00 : f32
    %293 = vector.broadcast %cst_62 : f32 to vector<2x32xf32>
    %294 = arith.addf %293, %292 : vector<2x32xf32>
    %295 = arith.divf %293, %294 : vector<2x32xf32>
    %296 = vector.extract_strided_slice %283 {offsets = [0, 64], sizes = [2, 32], strides = [1, 1]} : vector<2x128xf32> to vector<2x32xf32>
    %297 = math.tanh %296 : vector<2x32xf32>
    %298 = vector.extract_strided_slice %283 {offsets = [0, 96], sizes = [2, 32], strides = [1, 1]} : vector<2x128xf32> to vector<2x32xf32>
    %299 = arith.negf %298 : vector<2x32xf32>
    %300 = math.exp %299 : vector<2x32xf32>
    %cst_63 = arith.constant 1.000000e+00 : f32
    %301 = vector.broadcast %cst_63 : f32 to vector<2x32xf32>
    %302 = arith.addf %301, %300 : vector<2x32xf32>
    %303 = arith.divf %301, %302 : vector<2x32xf32>
    %304 = arith.mulf %295, %247 : vector<2x32xf32>
    %305 = arith.mulf %289, %297 : vector<2x32xf32>
    %306 = arith.addf %304, %305 : vector<2x32xf32>
    %307 = math.tanh %306 : vector<2x32xf32>
    %308 = arith.mulf %303, %307 : vector<2x32xf32>
    %cst_64 = arith.constant dense<0.000000e+00> : vector<2x128xf32>
    %309 = tpu.matmul %249, %1, %cst_64 {dimension_numbers = #tpu.dot_dimension_numbers<[1], [0], [0], [1], [0, 0, 1, 1], [], []>} : vector<2x32xf32>, vector<32x128xf32>, vector<2x128xf32> -> vector<2x128xf32>
    %310 = arith.addf %309, %6 : vector<2x128xf32>
    %cst_65 = arith.constant dense<0.000000e+00> : vector<2x128xf32>
    %311 = tpu.matmul %278, %3, %cst_65 {dimension_numbers = #tpu.dot_dimension_numbers<[1], [0], [0], [1], [0, 0, 1, 1], [], []>} : vector<2x32xf32>, vector<32x128xf32>, vector<2x128xf32> -> vector<2x128xf32>
    %312 = arith.addf %310, %311 : vector<2x128xf32>
    %313 = vector.extract_strided_slice %312 {offsets = [0, 0], sizes = [2, 32], strides = [1, 1]} : vector<2x128xf32> to vector<2x32xf32>
    %314 = arith.negf %313 : vector<2x32xf32>
    %315 = math.exp %314 : vector<2x32xf32>
    %cst_66 = arith.constant 1.000000e+00 : f32
    %316 = vector.broadcast %cst_66 : f32 to vector<2x32xf32>
    %317 = arith.addf %316, %315 : vector<2x32xf32>
    %318 = arith.divf %316, %317 : vector<2x32xf32>
    %319 = vector.extract_strided_slice %312 {offsets = [0, 32], sizes = [2, 32], strides = [1, 1]} : vector<2x128xf32> to vector<2x32xf32>
    %320 = arith.negf %319 : vector<2x32xf32>
    %321 = math.exp %320 : vector<2x32xf32>
    %cst_67 = arith.constant 1.000000e+00 : f32
    %322 = vector.broadcast %cst_67 : f32 to vector<2x32xf32>
    %323 = arith.addf %322, %321 : vector<2x32xf32>
    %324 = arith.divf %322, %323 : vector<2x32xf32>
    %325 = vector.extract_strided_slice %312 {offsets = [0, 64], sizes = [2, 32], strides = [1, 1]} : vector<2x128xf32> to vector<2x32xf32>
    %326 = math.tanh %325 : vector<2x32xf32>
    %327 = vector.extract_strided_slice %312 {offsets = [0, 96], sizes = [2, 32], strides = [1, 1]} : vector<2x128xf32> to vector<2x32xf32>
    %328 = arith.negf %327 : vector<2x32xf32>
    %329 = math.exp %328 : vector<2x32xf32>
    %cst_68 = arith.constant 1.000000e+00 : f32
    %330 = vector.broadcast %cst_68 : f32 to vector<2x32xf32>
    %331 = arith.addf %330, %329 : vector<2x32xf32>
    %332 = arith.divf %330, %331 : vector<2x32xf32>
    %333 = arith.mulf %324, %276 : vector<2x32xf32>
    %334 = arith.mulf %318, %326 : vector<2x32xf32>
    %335 = arith.addf %333, %334 : vector<2x32xf32>
    %336 = math.tanh %335 : vector<2x32xf32>
    %337 = arith.mulf %332, %336 : vector<2x32xf32>
    %c0_69 = arith.constant 0 : index
    %c128 = arith.constant 128 : index
    %338 = vector.load %arg7[%c0_69, %c128] : memref<2x256xf32, #tpu.memory_space<vmem>>, vector<2x32xf32>
    tpu.vector_store %arg7[%c0_69, %c128], %337 {strides = array<i32>} : memref<2x256xf32, #tpu.memory_space<vmem>>, vector<2x32xf32>,
    %339 = vector.extract_strided_slice %13 {offsets = [0, 6, 0], sizes = [2, 1, 128], strides = [1, 1, 1]} : vector<2x8x128xf32> to vector<2x1x128xf32>
    %340 = vector.shape_cast %339 : vector<2x1x128xf32> to vector<2x128xf32>
    %cst_70 = arith.constant dense<0.000000e+00> : vector<2x128xf32>
    %341 = tpu.matmul %308, %2, %cst_70 {dimension_numbers = #tpu.dot_dimension_numbers<[1], [0], [0], [1], [0, 0, 1, 1], [], []>} : vector<2x32xf32>, vector<32x128xf32>, vector<2x128xf32> -> vector<2x128xf32>
    %342 = arith.addf %340, %341 : vector<2x128xf32>
    %343 = vector.extract_strided_slice %342 {offsets = [0, 0], sizes = [2, 32], strides = [1, 1]} : vector<2x128xf32> to vector<2x32xf32>
    %344 = arith.negf %343 : vector<2x32xf32>
    %345 = math.exp %344 : vector<2x32xf32>
    %cst_71 = arith.constant 1.000000e+00 : f32
    %346 = vector.broadcast %cst_71 : f32 to vector<2x32xf32>
    %347 = arith.addf %346, %345 : vector<2x32xf32>
    %348 = arith.divf %346, %347 : vector<2x32xf32>
    %349 = vector.extract_strided_slice %342 {offsets = [0, 32], sizes = [2, 32], strides = [1, 1]} : vector<2x128xf32> to vector<2x32xf32>
    %350 = arith.negf %349 : vector<2x32xf32>
    %351 = math.exp %350 : vector<2x32xf32>
    %cst_72 = arith.constant 1.000000e+00 : f32
    %352 = vector.broadcast %cst_72 : f32 to vector<2x32xf32>
    %353 = arith.addf %352, %351 : vector<2x32xf32>
    %354 = arith.divf %352, %353 : vector<2x32xf32>
    %355 = vector.extract_strided_slice %342 {offsets = [0, 64], sizes = [2, 32], strides = [1, 1]} : vector<2x128xf32> to vector<2x32xf32>
    %356 = math.tanh %355 : vector<2x32xf32>
    %357 = vector.extract_strided_slice %342 {offsets = [0, 96], sizes = [2, 32], strides = [1, 1]} : vector<2x128xf32> to vector<2x32xf32>
    %358 = arith.negf %357 : vector<2x32xf32>
    %359 = math.exp %358 : vector<2x32xf32>
    %cst_73 = arith.constant 1.000000e+00 : f32
    %360 = vector.broadcast %cst_73 : f32 to vector<2x32xf32>
    %361 = arith.addf %360, %359 : vector<2x32xf32>
    %362 = arith.divf %360, %361 : vector<2x32xf32>
    %363 = arith.mulf %354, %306 : vector<2x32xf32>
    %364 = arith.mulf %348, %356 : vector<2x32xf32>
    %365 = arith.addf %363, %364 : vector<2x32xf32>
    %366 = math.tanh %365 : vector<2x32xf32>
    %367 = arith.mulf %362, %366 : vector<2x32xf32>
    %cst_74 = arith.constant dense<0.000000e+00> : vector<2x128xf32>
    %368 = tpu.matmul %308, %1, %cst_74 {dimension_numbers = #tpu.dot_dimension_numbers<[1], [0], [0], [1], [0, 0, 1, 1], [], []>} : vector<2x32xf32>, vector<32x128xf32>, vector<2x128xf32> -> vector<2x128xf32>
    %369 = arith.addf %368, %6 : vector<2x128xf32>
    %cst_75 = arith.constant dense<0.000000e+00> : vector<2x128xf32>
    %370 = tpu.matmul %337, %3, %cst_75 {dimension_numbers = #tpu.dot_dimension_numbers<[1], [0], [0], [1], [0, 0, 1, 1], [], []>} : vector<2x32xf32>, vector<32x128xf32>, vector<2x128xf32> -> vector<2x128xf32>
    %371 = arith.addf %369, %370 : vector<2x128xf32>
    %372 = vector.extract_strided_slice %371 {offsets = [0, 0], sizes = [2, 32], strides = [1, 1]} : vector<2x128xf32> to vector<2x32xf32>
    %373 = arith.negf %372 : vector<2x32xf32>
    %374 = math.exp %373 : vector<2x32xf32>
    %cst_76 = arith.constant 1.000000e+00 : f32
    %375 = vector.broadcast %cst_76 : f32 to vector<2x32xf32>
    %376 = arith.addf %375, %374 : vector<2x32xf32>
    %377 = arith.divf %375, %376 : vector<2x32xf32>
    %378 = vector.extract_strided_slice %371 {offsets = [0, 32], sizes = [2, 32], strides = [1, 1]} : vector<2x128xf32> to vector<2x32xf32>
    %379 = arith.negf %378 : vector<2x32xf32>
    %380 = math.exp %379 : vector<2x32xf32>
    %cst_77 = arith.constant 1.000000e+00 : f32
    %381 = vector.broadcast %cst_77 : f32 to vector<2x32xf32>
    %382 = arith.addf %381, %380 : vector<2x32xf32>
    %383 = arith.divf %381, %382 : vector<2x32xf32>
    %384 = vector.extract_strided_slice %371 {offsets = [0, 64], sizes = [2, 32], strides = [1, 1]} : vector<2x128xf32> to vector<2x32xf32>
    %385 = math.tanh %384 : vector<2x32xf32>
    %386 = vector.extract_strided_slice %371 {offsets = [0, 96], sizes = [2, 32], strides = [1, 1]} : vector<2x128xf32> to vector<2x32xf32>
    %387 = arith.negf %386 : vector<2x32xf32>
    %388 = math.exp %387 : vector<2x32xf32>
    %cst_78 = arith.constant 1.000000e+00 : f32
    %389 = vector.broadcast %cst_78 : f32 to vector<2x32xf32>
    %390 = arith.addf %389, %388 : vector<2x32xf32>
    %391 = arith.divf %389, %390 : vector<2x32xf32>
    %392 = arith.mulf %383, %335 : vector<2x32xf32>
    %393 = arith.mulf %377, %385 : vector<2x32xf32>
    %394 = arith.addf %392, %393 : vector<2x32xf32>
    %395 = math.tanh %394 : vector<2x32xf32>
    %396 = arith.mulf %391, %395 : vector<2x32xf32>
    %c0_79 = arith.constant 0 : index
    %c160 = arith.constant 160 : index
    %397 = vector.load %arg7[%c0_79, %c160] : memref<2x256xf32, #tpu.memory_space<vmem>>, vector<2x32xf32>
    tpu.vector_store %arg7[%c0_79, %c160], %396 {strides = array<i32>} : memref<2x256xf32, #tpu.memory_space<vmem>>, vector<2x32xf32>,
    %398 = vector.extract_strided_slice %13 {offsets = [0, 7, 0], sizes = [2, 1, 128], strides = [1, 1, 1]} : vector<2x8x128xf32> to vector<2x1x128xf32>
    %399 = vector.shape_cast %398 : vector<2x1x128xf32> to vector<2x128xf32>
    %cst_80 = arith.constant dense<0.000000e+00> : vector<2x128xf32>
    %400 = tpu.matmul %367, %2, %cst_80 {dimension_numbers = #tpu.dot_dimension_numbers<[1], [0], [0], [1], [0, 0, 1, 1], [], []>} : vector<2x32xf32>, vector<32x128xf32>, vector<2x128xf32> -> vector<2x128xf32>
    %401 = arith.addf %399, %400 : vector<2x128xf32>
    %402 = vector.extract_strided_slice %401 {offsets = [0, 0], sizes = [2, 32], strides = [1, 1]} : vector<2x128xf32> to vector<2x32xf32>
    %403 = arith.negf %402 : vector<2x32xf32>
    %404 = math.exp %403 : vector<2x32xf32>
    %cst_81 = arith.constant 1.000000e+00 : f32
    %405 = vector.broadcast %cst_81 : f32 to vector<2x32xf32>
    %406 = arith.addf %405, %404 : vector<2x32xf32>
    %407 = arith.divf %405, %406 : vector<2x32xf32>
    %408 = vector.extract_strided_slice %401 {offsets = [0, 32], sizes = [2, 32], strides = [1, 1]} : vector<2x128xf32> to vector<2x32xf32>
    %409 = arith.negf %408 : vector<2x32xf32>
    %410 = math.exp %409 : vector<2x32xf32>
    %cst_82 = arith.constant 1.000000e+00 : f32
    %411 = vector.broadcast %cst_82 : f32 to vector<2x32xf32>
    %412 = arith.addf %411, %410 : vector<2x32xf32>
    %413 = arith.divf %411, %412 : vector<2x32xf32>
    %414 = vector.extract_strided_slice %401 {offsets = [0, 64], sizes = [2, 32], strides = [1, 1]} : vector<2x128xf32> to vector<2x32xf32>
    %415 = math.tanh %414 : vector<2x32xf32>
    %416 = vector.extract_strided_slice %401 {offsets = [0, 96], sizes = [2, 32], strides = [1, 1]} : vector<2x128xf32> to vector<2x32xf32>
    %417 = arith.negf %416 : vector<2x32xf32>
    %418 = math.exp %417 : vector<2x32xf32>
    %cst_83 = arith.constant 1.000000e+00 : f32
    %419 = vector.broadcast %cst_83 : f32 to vector<2x32xf32>
    %420 = arith.addf %419, %418 : vector<2x32xf32>
    %421 = arith.divf %419, %420 : vector<2x32xf32>
    %422 = arith.mulf %413, %365 : vector<2x32xf32>
    %423 = arith.mulf %407, %415 : vector<2x32xf32>
    %424 = arith.addf %422, %423 : vector<2x32xf32>
    %425 = math.tanh %424 : vector<2x32xf32>
    %426 = arith.mulf %421, %425 : vector<2x32xf32>
    %cst_84 = arith.constant dense<0.000000e+00> : vector<2x128xf32>
    %427 = tpu.matmul %367, %1, %cst_84 {dimension_numbers = #tpu.dot_dimension_numbers<[1], [0], [0], [1], [0, 0, 1, 1], [], []>} : vector<2x32xf32>, vector<32x128xf32>, vector<2x128xf32> -> vector<2x128xf32>
    %428 = arith.addf %427, %6 : vector<2x128xf32>
    %cst_85 = arith.constant dense<0.000000e+00> : vector<2x128xf32>
    %429 = tpu.matmul %396, %3, %cst_85 {dimension_numbers = #tpu.dot_dimension_numbers<[1], [0], [0], [1], [0, 0, 1, 1], [], []>} : vector<2x32xf32>, vector<32x128xf32>, vector<2x128xf32> -> vector<2x128xf32>
    %430 = arith.addf %428, %429 : vector<2x128xf32>
    %431 = vector.extract_strided_slice %430 {offsets = [0, 0], sizes = [2, 32], strides = [1, 1]} : vector<2x128xf32> to vector<2x32xf32>
    %432 = arith.negf %431 : vector<2x32xf32>
    %433 = math.exp %432 : vector<2x32xf32>
    %cst_86 = arith.constant 1.000000e+00 : f32
    %434 = vector.broadcast %cst_86 : f32 to vector<2x32xf32>
    %435 = arith.addf %434, %433 : vector<2x32xf32>
    %436 = arith.divf %434, %435 : vector<2x32xf32>
    %437 = vector.extract_strided_slice %430 {offsets = [0, 32], sizes = [2, 32], strides = [1, 1]} : vector<2x128xf32> to vector<2x32xf32>
    %438 = arith.negf %437 : vector<2x32xf32>
    %439 = math.exp %438 : vector<2x32xf32>
    %cst_87 = arith.constant 1.000000e+00 : f32
    %440 = vector.broadcast %cst_87 : f32 to vector<2x32xf32>
    %441 = arith.addf %440, %439 : vector<2x32xf32>
    %442 = arith.divf %440, %441 : vector<2x32xf32>
    %443 = vector.extract_strided_slice %430 {offsets = [0, 64], sizes = [2, 32], strides = [1, 1]} : vector<2x128xf32> to vector<2x32xf32>
    %444 = math.tanh %443 : vector<2x32xf32>
    %445 = vector.extract_strided_slice %430 {offsets = [0, 96], sizes = [2, 32], strides = [1, 1]} : vector<2x128xf32> to vector<2x32xf32>
    %446 = arith.negf %445 : vector<2x32xf32>
    %447 = math.exp %446 : vector<2x32xf32>
    %cst_88 = arith.constant 1.000000e+00 : f32
    %448 = vector.broadcast %cst_88 : f32 to vector<2x32xf32>
    %449 = arith.addf %448, %447 : vector<2x32xf32>
    %450 = arith.divf %448, %449 : vector<2x32xf32>
    %451 = arith.mulf %442, %394 : vector<2x32xf32>
    %452 = arith.mulf %436, %444 : vector<2x32xf32>
    %453 = arith.addf %451, %452 : vector<2x32xf32>
    %454 = math.tanh %453 : vector<2x32xf32>
    %455 = arith.mulf %450, %454 : vector<2x32xf32>
    %c0_89 = arith.constant 0 : index
    %c192 = arith.constant 192 : index
    %456 = vector.load %arg7[%c0_89, %c192] : memref<2x256xf32, #tpu.memory_space<vmem>>, vector<2x32xf32>
    tpu.vector_store %arg7[%c0_89, %c192], %455 {strides = array<i32>} : memref<2x256xf32, #tpu.memory_space<vmem>>, vector<2x32xf32>,
    %cst_90 = arith.constant dense<0.000000e+00> : vector<2x128xf32>
    %457 = tpu.matmul %426, %1, %cst_90 {dimension_numbers = #tpu.dot_dimension_numbers<[1], [0], [0], [1], [0, 0, 1, 1], [], []>} : vector<2x32xf32>, vector<32x128xf32>, vector<2x128xf32> -> vector<2x128xf32>
    %458 = arith.addf %457, %6 : vector<2x128xf32>
    %cst_91 = arith.constant dense<0.000000e+00> : vector<2x128xf32>
    %459 = tpu.matmul %455, %3, %cst_91 {dimension_numbers = #tpu.dot_dimension_numbers<[1], [0], [0], [1], [0, 0, 1, 1], [], []>} : vector<2x32xf32>, vector<32x128xf32>, vector<2x128xf32> -> vector<2x128xf32>
    %460 = arith.addf %458, %459 : vector<2x128xf32>
    %461 = vector.extract_strided_slice %460 {offsets = [0, 0], sizes = [2, 32], strides = [1, 1]} : vector<2x128xf32> to vector<2x32xf32>
    %462 = arith.negf %461 : vector<2x32xf32>
    %463 = math.exp %462 : vector<2x32xf32>
    %cst_92 = arith.constant 1.000000e+00 : f32
    %464 = vector.broadcast %cst_92 : f32 to vector<2x32xf32>
    %465 = arith.addf %464, %463 : vector<2x32xf32>
    %466 = arith.divf %464, %465 : vector<2x32xf32>
    %467 = vector.extract_strided_slice %460 {offsets = [0, 32], sizes = [2, 32], strides = [1, 1]} : vector<2x128xf32> to vector<2x32xf32>
    %468 = arith.negf %467 : vector<2x32xf32>
    %469 = math.exp %468 : vector<2x32xf32>
    %cst_93 = arith.constant 1.000000e+00 : f32
    %470 = vector.broadcast %cst_93 : f32 to vector<2x32xf32>
    %471 = arith.addf %470, %469 : vector<2x32xf32>
    %472 = arith.divf %470, %471 : vector<2x32xf32>
    %473 = vector.extract_strided_slice %460 {offsets = [0, 64], sizes = [2, 32], strides = [1, 1]} : vector<2x128xf32> to vector<2x32xf32>
    %474 = math.tanh %473 : vector<2x32xf32>
    %475 = vector.extract_strided_slice %460 {offsets = [0, 96], sizes = [2, 32], strides = [1, 1]} : vector<2x128xf32> to vector<2x32xf32>
    %476 = arith.negf %475 : vector<2x32xf32>
    %477 = math.exp %476 : vector<2x32xf32>
    %cst_94 = arith.constant 1.000000e+00 : f32
    %478 = vector.broadcast %cst_94 : f32 to vector<2x32xf32>
    %479 = arith.addf %478, %477 : vector<2x32xf32>
    %480 = arith.divf %478, %479 : vector<2x32xf32>
    %481 = arith.mulf %472, %453 : vector<2x32xf32>
    %482 = arith.mulf %466, %474 : vector<2x32xf32>
    %483 = arith.addf %481, %482 : vector<2x32xf32>
    %484 = math.tanh %483 : vector<2x32xf32>
    %485 = arith.mulf %480, %484 : vector<2x32xf32>
    %c0_95 = arith.constant 0 : index
    %c224 = arith.constant 224 : index
    %486 = vector.load %arg7[%c0_95, %c224] : memref<2x256xf32, #tpu.memory_space<vmem>>, vector<2x32xf32>
    tpu.vector_store %arg7[%c0_95, %c224], %485 {strides = array<i32>} : memref<2x256xf32, #tpu.memory_space<vmem>>, vector<2x32xf32>,
    return
  }
}

</mosaic_0001>

<llo_original>
// kernel: temporal_converge_lstm_forward.1
$region0: #{temporal_converge_lstm_forward.1}
  #allocation0 [shape = 'u32[]', space=smem, size = 0x4, offset = 0x4, fixed_abs, tag = 'smem constant byte address 0x4 - core index']
  #allocation1 [shape = 'u32[72,128]{1,0:T(1,128)}', space=vmem, size = 0x9000, scoped, tag = 'internal scratch']
  %s0 = inlined_call_operand.hbm [shape: f32[2,8,32], index: 0, kind: input, shape index: {}]
  %s1 = inlined_call_operand.hbm [shape: f32[32,128], index: 1, kind: input, shape index: {}]
  %s2 = inlined_call_operand.hbm [shape: f32[32,128], index: 2, kind: input, shape index: {}]
  %s3 = inlined_call_operand.hbm [shape: f32[1,128], index: 3, kind: input, shape index: {}]
  %s4 = inlined_call_operand.hbm [shape: f32[32,128], index: 4, kind: input, shape index: {}]
  %s5 = inlined_call_operand.hbm [shape: f32[32,128], index: 5, kind: input, shape index: {}]
  %s6 = inlined_call_operand.vmem [shape: f32[1,128], index: 6, kind: input, shape index: {}]
  %s7 = inlined_call_operand.vmem [shape: f32[2,256], index: 7, kind: output, shape index: {}]
  %s8 = sld [smem:[#allocation0]]
  $region62: #{temporal_converge_lstm_forward.1} parent=0
    _
  %s10 = ssub.s32 1, %s8
  %s11 = scalar_select 0, %s10, %s8
  $region1: #{temporal_converge_lstm_forward.1} parent=0
    #allocation2 [shape = 'u8[8192]{0}', space=vmem, size = 0x2000, scoped, tag = 'input window, operand 0, single buffered']
    #allocation3 [shape = 's32[1]{0}', space=sflag, size = 0x4, scoped, tag = 'scoped memory for temporal_converge_lstm_forward.1']
    #allocation4 [shape = 'u8[16384]{0}', space=vmem, size = 0x4000, scoped, tag = 'input window, operand 1, single buffered']
    #allocation5 [shape = 's32[1]{0}', space=sflag, size = 0x4, scoped, tag = 'scoped memory for temporal_converge_lstm_forward.1']
    #allocation6 [shape = 'u8[16384]{0}', space=vmem, size = 0x4000, scoped, tag = 'input window, operand 2, single buffered']
    #allocation7 [shape = 'u8[512]{0}', space=vmem, size = 0x400, scoped, tag = 'input window, operand 3, single buffered']
    #allocation8 [shape = 's32[1]{0}', space=sflag, size = 0x4, scoped, tag = 'scoped memory for temporal_converge_lstm_forward.1']
    #allocation9 [shape = 'u8[16384]{0}', space=vmem, size = 0x4000, scoped, tag = 'input window, operand 4, single buffered']
    #allocation10 [shape = 'u8[16384]{0}', space=vmem, size = 0x4000, scoped, tag = 'input window, operand 5, single buffered']
    #allocation11 [shape = 's32[1]{0}', space=sflag, size = 0x4, scoped, tag = 'scoped memory for temporal_converge_lstm_forward.1']
    %12 = vsyncpa [#allocation3], 0
    %13 = vsyncpa [#allocation5], 0
    %14 = vsyncpa [#allocation8], 0
    %15 = vsyncpa [#allocation11], 0
    // Predicated region
    $region2: #{temporal_converge_lstm_forward.1} parent=1 // pred_check
      _
    $region3: #{temporal_converge_lstm_forward.1} parent=1 // pred_check_branch
      %17 = sbr.rel (0) target = $region5
    $region4: #{temporal_converge_lstm_forward.1} parent=1 // pred_region
      %19 = vsyncadd [#allocation3], 0
      %s20 = sshll.u32 %s0, 4
      %s21 = int_to_ptr.hbm [resolvable:$true] %s20
      %s22 = sshll.u32 [#allocation2], 4
      %s23 = int_to_ptr.vmem [resolvable:$true] %s22
      %28 = dma.hbm_to_vmem [thread:$0]  %s21, 256, %s23, [#allocation3], 128, 128, 8
    $region5: #{temporal_converge_lstm_forward.1} parent=1 // pred_fallthru
      _
    // Predicated region
    $region6: #{temporal_converge_lstm_forward.1} parent=1 // pred_check
      _
    $region7: #{temporal_converge_lstm_forward.1} parent=1 // pred_check_branch
      %30 = sbr.rel (0) target = $region9
    $region8: #{temporal_converge_lstm_forward.1} parent=1 // pred_region
      %32 = vsyncadd [#allocation5], 0
      %s33 = sshll.u32 %s1, 4
      %s34 = int_to_ptr.hbm [resolvable:$true] %s33
      %s35 = sshll.u32 [#allocation4], 4
      %s36 = int_to_ptr.vmem [resolvable:$true] %s35
      %41 = dma.hbm_to_vmem [thread:$0]  %s34, 512, %s36, [#allocation5], 128, 128, 8
    $region9: #{temporal_converge_lstm_forward.1} parent=1 // pred_fallthru
      _
    // Predicated region
    $region10: #{temporal_converge_lstm_forward.1} parent=1 // pred_check
      _
    $region11: #{temporal_converge_lstm_forward.1} parent=1 // pred_check_branch
      %43 = sbr.rel (0) target = $region13
    $region12: #{temporal_converge_lstm_forward.1} parent=1 // pred_region
      %45 = vsyncadd [#allocation5], 0
      %s46 = sshll.u32 %s2, 4
      %s47 = int_to_ptr.hbm [resolvable:$true] %s46
      %s48 = sshll.u32 [#allocation6], 4
      %s49 = int_to_ptr.vmem [resolvable:$true] %s48
      %54 = dma.hbm_to_vmem [thread:$0]  %s47, 512, %s49, [#allocation5], 128, 128, 8
    $region13: #{temporal_converge_lstm_forward.1} parent=1 // pred_fallthru
      _
    // Predicated region
    $region14: #{temporal_converge_lstm_forward.1} parent=1 // pred_check
      _
    $region15: #{temporal_converge_lstm_forward.1} parent=1 // pred_check_branch
      %56 = sbr.rel (0) target = $region17
    $region16: #{temporal_converge_lstm_forward.1} parent=1 // pred_region
      %58 = vsyncadd [#allocation8], 0
      %s60 = sshll.u32 %s3, 4
      %s61 = int_to_ptr.hbm [resolvable:$true] %s60
      %s62 = sshll.u32 [#allocation7], 4
      %s63 = int_to_ptr.vmem [resolvable:$true] %s62
      %65 = dma.hbm_to_vmem [thread:$0]  %s61, 16, %s63, [#allocation8]
    $region17: #{temporal_converge_lstm_forward.1} parent=1 // pred_fallthru
      _
    // Predicated region
    $region18: #{temporal_converge_lstm_forward.1} parent=1 // pred_check
      _
    $region19: #{temporal_converge_lstm_forward.1} parent=1 // pred_check_branch
      %67 = sbr.rel (0) target = $region21
    $region20: #{temporal_converge_lstm_forward.1} parent=1 // pred_region
      %69 = vsyncadd [#allocation8], 0
      %s70 = sshll.u32 %s4, 4
      %s71 = int_to_ptr.hbm [resolvable:$true] %s70
      %s72 = sshll.u32 [#allocation9], 4
      %s73 = int_to_ptr.vmem [resolvable:$true] %s72
      %78 = dma.hbm_to_vmem [thread:$0]  %s71, 512, %s73, [#allocation8], 128, 128, 8
    $region21: #{temporal_converge_lstm_forward.1} parent=1 // pred_fallthru
      _
    // Predicated region
    $region22: #{temporal_converge_lstm_forward.1} parent=1 // pred_check
      _
    $region23: #{temporal_converge_lstm_forward.1} parent=1 // pred_check_branch
      %80 = sbr.rel (0) target = $region25
    $region24: #{temporal_converge_lstm_forward.1} parent=1 // pred_region
      %82 = vsyncadd [#allocation11], 0
      %s83 = sshll.u32 %s5, 4
      %s84 = int_to_ptr.hbm [resolvable:$true] %s83
      %s85 = sshll.u32 [#allocation10], 4
      %s86 = int_to_ptr.vmem [resolvable:$true] %s85
      %91 = dma.hbm_to_vmem [thread:$0]  %s84, 512, %s86, [#allocation11], 128, 128, 8
    $region25: #{temporal_converge_lstm_forward.1} parent=1 // pred_fallthru
      _
    // Predicated region
    $region26: #{temporal_converge_lstm_forward.1} parent=1 // pred_check
      _
    $region27: #{temporal_converge_lstm_forward.1} parent=1 // pred_check_branch
      %93 = sbr.rel (0) target = $region29
    $region28: #{temporal_converge_lstm_forward.1} parent=1 // pred_region
      _
    $region29: #{temporal_converge_lstm_forward.1} parent=1 // pred_fallthru
      _
    // Predicated region
    $region30: #{temporal_converge_lstm_forward.1} parent=1 // pred_check
      _
    $region31: #{temporal_converge_lstm_forward.1} parent=1 // pred_check_branch
      %95 = sbr.rel (0) target = $region33
    $region32: #{temporal_converge_lstm_forward.1} parent=1 // pred_region
      %97 = dma.done [#allocation3], 256
    $region33: #{temporal_converge_lstm_forward.1} parent=1 // pred_fallthru
      _
    // Predicated region
    $region34: #{temporal_converge_lstm_forward.1} parent=1 // pred_check
      _
    $region35: #{temporal_converge_lstm_forward.1} parent=1 // pred_check_branch
      %99 = sbr.rel (0) target = $region37
    $region36: #{temporal_converge_lstm_forward.1} parent=1 // pred_region
      %101 = dma.done [#allocation5], 512
    $region37: #{temporal_converge_lstm_forward.1} parent=1 // pred_fallthru
      _
    // Predicated region
    $region38: #{temporal_converge_lstm_forward.1} parent=1 // pred_check
      _
    $region39: #{temporal_converge_lstm_forward.1} parent=1 // pred_check_branch
      %103 = sbr.rel (0) target = $region41
    $region40: #{temporal_converge_lstm_forward.1} parent=1 // pred_region
      %105 = dma.done [#allocation5], 512
    $region41: #{temporal_converge_lstm_forward.1} parent=1 // pred_fallthru
      _
    // Predicated region
    $region42: #{temporal_converge_lstm_forward.1} parent=1 // pred_check
      _
    $region43: #{temporal_converge_lstm_forward.1} parent=1 // pred_check_branch
      %107 = sbr.rel (0) target = $region45
    $region44: #{temporal_converge_lstm_forward.1} parent=1 // pred_region
      %109 = dma.done [#allocation8], 16
    $region45: #{temporal_converge_lstm_forward.1} parent=1 // pred_fallthru
      _
    // Predicated region
    $region46: #{temporal_converge_lstm_forward.1} parent=1 // pred_check
      _
    $region47: #{temporal_converge_lstm_forward.1} parent=1 // pred_check_branch
      %111 = sbr.rel (0) target = $region49
    $region48: #{temporal_converge_lstm_forward.1} parent=1 // pred_region
      %113 = dma.done [#allocation8], 512
    $region49: #{temporal_converge_lstm_forward.1} parent=1 // pred_fallthru
      _
    // Predicated region
    $region50: #{temporal_converge_lstm_forward.1} parent=1 // pred_check
      _
    $region51: #{temporal_converge_lstm_forward.1} parent=1 // pred_check_branch
      %115 = sbr.rel (0) target = $region53
    $region52: #{temporal_converge_lstm_forward.1} parent=1 // pred_region
      %117 = dma.done [#allocation11], 512
    $region53: #{temporal_converge_lstm_forward.1} parent=1 // pred_fallthru
      _
    %v118 = vld [vmem:[#allocation4] sm:$0xff]
    %v119 = vld [vmem:[#allocation4 + $0x8] sm:$0xff]
    %v120 = vld [vmem:[#allocation4 + $0x10] sm:$0xff]
    %v121 = vld [vmem:[#allocation4 + $0x18] sm:$0xff]
    %v122 = vld [vmem:[#allocation9] sm:$0xff]
    %v123 = vld [vmem:[#allocation9 + $0x8] sm:$0xff]
    %v124 = vld [vmem:[#allocation9 + $0x10] sm:$0xff]
    %v125 = vld [vmem:[#allocation9 + $0x18] sm:$0xff]
    %v126 = vld [vmem:[#allocation6] sm:$0xff]
    %v127 = vld [vmem:[#allocation6 + $0x8] sm:$0xff]
    %v128 = vld [vmem:[#allocation6 + $0x10] sm:$0xff]
    %v129 = vld [vmem:[#allocation6 + $0x18] sm:$0xff]
    %v130 = vld [vmem:[#allocation10] sm:$0xff]
    %v131 = vld [vmem:[#allocation10 + $0x8] sm:$0xff]
    %v132 = vld [vmem:[#allocation10 + $0x10] sm:$0xff]
    %v133 = vld [vmem:[#allocation10 + $0x18] sm:$0xff]
    %v134 = vld [vmem:[%s6] sm:$0x1]
    %v136 = vperm.slane %v134, 0
    %v138 = vld [vmem:[#allocation2] sm:$0xff]
    %v139 = vld [vmem:[#allocation2 + $0x8] sm:$0xff]
    %v140 = vld [vmem:[#allocation7] sm:$0x1]
    %v142 = vperm.slane %v140, 0
    %vm144 = vcmask 261120
    %v146 = vsel %vm144, %v138, 0
    %v149 = vsel %vm144, %v139, 0
    %151 = vmatpush.msra.mxu0 0.0
    %152 = vmatpush.msra.mxu0 0.0
    %153 = vmatpush.msra.mxu0 0.0
    %154 = vmatpush.msra.mxu0 0.0
    %155 = vmatpush.msra.mxu0 0.0
    %156 = vmatpush.msra.mxu0 0.0
    %157 = vmatpush.msra.mxu0 0.0
    %158 = vmatpush.msra.mxu0 0.0
    %159 = vmatpush.msra.mxu0 0.0
    %160 = vmatpush.msra.mxu0 0.0
    %161 = vmatpush.msra.mxu0 0.0
    %162 = vmatpush.msra.mxu0 0.0
    %163 = vmatpush.msra.mxu0 %v121
    %164 = vmatpush.msra.mxu0 %v120
    %165 = vmatpush.msra.mxu0 %v119
    %166 = vmatpush.msra.mxu0 %v118
    %167 = vmatmul.f32.gmra.mxu0 %v146
    %v168 = vpop.f32.mrf.mxu0
    %v169 = vadd.f32 %v142, %v168
    %170 = vmatmul.f32.gmra.mxu0 %v149
    %v171 = vpop.f32.mrf.mxu0
    %v172 = vadd.f32 %v142, %v171
    %173 = vdwg.mxu0
    %v175 = vsel %vm144, 0.0, 0
    %177 = vmatpush.msra.mxu0 0.0
    %178 = vmatpush.msra.mxu0 0.0
    %179 = vmatpush.msra.mxu0 0.0
    %180 = vmatpush.msra.mxu0 0.0
    %181 = vmatpush.msra.mxu0 0.0
    %182 = vmatpush.msra.mxu0 0.0
    %183 = vmatpush.msra.mxu0 0.0
    %184 = vmatpush.msra.mxu0 0.0
    %185 = vmatpush.msra.mxu0 0.0
    %186 = vmatpush.msra.mxu0 0.0
    %187 = vmatpush.msra.mxu0 0.0
    %188 = vmatpush.msra.mxu0 0.0
    %189 = vmatpush.msra.mxu0 %v129
    %190 = vmatpush.msra.mxu0 %v128
    %191 = vmatpush.msra.mxu0 %v127
    %192 = vmatpush.msra.mxu0 %v126
    %193 = vmatmul.f32.gmra.mxu0 %v175
    %v194 = vpop.f32.mrf.mxu0
    %v195 = vadd.f32 0.0, %v194
    %196 = vdwg.mxu0
    %v198 = vrot.slane %v195, 1
    %v201 = vadd.f32 %v169, %v195
    %v202 = vadd.f32 %v172, %v198
    %v203 = vxor.u32 %v201, 2147483648
    %v204 = vxor.u32 %v202, 2147483648
    %v205 = vmul.f32 %v203, 1.442695
    %v206 = vpow.pop %v205
    %v207 = vmul.f32 %v204, 1.442695
    %v208 = vpow.pop %v207
    %v209 = vadd.f32 %v206, 1.0
    %v210 = vadd.f32 %v208, 1.0
    %v211 = vrcp.pop %v209
    %v212 = vmul.f32 %v209, %v211
    %v213 = vsub.f32 1.0, %v212
    %v214 = vmul.f32 %v211, %v213
    %v215 = vadd.f32 %v211, %v214
    %vm216 = vweird.f32 %v209
    %vm217 = vweird.f32 %v211
    %vm218 = vmor %vm216, %vm217
    %v219 = vsel %vm218, %v211, %v215
    %v220 = vand.u32 2147483647, %v209
    %vm221 = vcmp.eq.f32.partialorder %v220, 8.507059e+37
    %v222 = vand.u32 %v209, 2147483648
    %v223 = vor.u32 1.1754944e-38, %v222
    %v224 = vsel %vm221, %v223, %v219
    %v225 = vmul.f32 1.0, %v224
    %v226 = vrcp.pop %v210
    %v227 = vmul.f32 %v210, %v226
    %v228 = vsub.f32 1.0, %v227
    %v229 = vmul.f32 %v226, %v228
    %v230 = vadd.f32 %v226, %v229
    %vm231 = vweird.f32 %v210
    %vm232 = vweird.f32 %v226
    %vm233 = vmor %vm231, %vm232
    %v234 = vsel %vm233, %v226, %v230
    %v235 = vand.u32 2147483647, %v210
    %vm236 = vcmp.eq.f32.partialorder %v235, 8.507059e+37
    %v237 = vand.u32 %v210, 2147483648
    %v238 = vor.u32 1.1754944e-38, %v237
    %v239 = vsel %vm236, %v238, %v234
    %v240 = vmul.f32 1.0, %v239
    %v241 = vtanh.pop %v201
    %v242 = vtanh.pop %v202
    %v243 = vmul.f32 %v225, 0.0
    %v244 = vmul.f32 %v240, 0.0
    %247 = vrot.lane.b32.xlu0 %v241, 64
    %v248 = vpop.permute.xlu0 %247
    %249 = vrot.lane.b32.xlu0 %v242, 64
    %v250 = vpop.permute.xlu0 %249
    %v253 = vmul.f32 %v225, %v248
    %v254 = vmul.f32 %v240, %v250
    %257 = vrot.lane.b32.xlu0 %v253, 32
    %v258 = vpop.permute.xlu0 %257
    %259 = vrot.lane.b32.xlu0 %v254, 32
    %v260 = vpop.permute.xlu0 %259
    %v263 = vadd.f32 %v243, %v258
    %v264 = vadd.f32 %v244, %v260
    %v265 = vtanh.pop %v263
    %v266 = vtanh.pop %v264
    %269 = vrot.lane.b32.xlu0 %v265, 64
    %v270 = vpop.permute.xlu0 %269
    %271 = vrot.lane.b32.xlu0 %v266, 64
    %v272 = vpop.permute.xlu0 %271
    %v275 = vmul.f32 %v225, %v270
    %v276 = vmul.f32 %v240, %v272
    %v279 = vrot.slane %v276, 7
    %vm280 = vcmask 1041409
    %v281 = vsel %vm280, %v279, %v275
    %282 = vrot.lane.b32.xlu0 %v281, 32
    %v283 = vpop.permute.xlu0 %282
    %v284 = vsel %vm144, %v283, 0
    %286 = vmatpush.msra.mxu0 0.0
    %287 = vmatpush.msra.mxu0 0.0
    %288 = vmatpush.msra.mxu0 0.0
    %289 = vmatpush.msra.mxu0 0.0
    %290 = vmatpush.msra.mxu0 0.0
    %291 = vmatpush.msra.mxu0 0.0
    %292 = vmatpush.msra.mxu0 0.0
    %293 = vmatpush.msra.mxu0 0.0
    %294 = vmatpush.msra.mxu0 0.0
    %295 = vmatpush.msra.mxu0 0.0
    %296 = vmatpush.msra.mxu0 0.0
    %297 = vmatpush.msra.mxu0 0.0
    %298 = vmatpush.msra.mxu0 %v129
    %299 = vmatpush.msra.mxu0 %v128
    %300 = vmatpush.msra.mxu0 %v127
    %301 = vmatpush.msra.mxu0 %v126
    %302 = vmatmul.f32.gmra.mxu0 %v284
    %v303 = vpop.f32.mrf.mxu0
    %v304 = vadd.f32 0.0, %v303
    %305 = vdwg.mxu0
    %v307 = vrot.slane %v304, 7
    %v310 = vadd.f32 %v169, %v307
    %v311 = vadd.f32 %v172, %v304
    %v312 = vxor.u32 %v310, 2147483648
    %v313 = vxor.u32 %v311, 2147483648
    %v314 = vmul.f32 %v312, 1.442695
    %v315 = vpow.pop %v314
    %v316 = vmul.f32 %v313, 1.442695
    %v317 = vpow.pop %v316
    %v318 = vadd.f32 %v315, 1.0
    %v319 = vadd.f32 %v317, 1.0
    %v320 = vrcp.pop %v318
    %v321 = vmul.f32 %v318, %v320
    %v322 = vsub.f32 1.0, %v321
    %v323 = vmul.f32 %v320, %v322
    %v324 = vadd.f32 %v320, %v323
    %vm325 = vweird.f32 %v318
    %vm326 = vweird.f32 %v320
    %vm327 = vmor %vm325, %vm326
    %v328 = vsel %vm327, %v320, %v324
    %v329 = vand.u32 2147483647, %v318
    %vm330 = vcmp.eq.f32.partialorder %v329, 8.507059e+37
    %v331 = vand.u32 %v318, 2147483648
    %v332 = vor.u32 1.1754944e-38, %v331
    %v333 = vsel %vm330, %v332, %v328
    %v334 = vmul.f32 1.0, %v333
    %v335 = vrcp.pop %v319
    %v336 = vmul.f32 %v319, %v335
    %v337 = vsub.f32 1.0, %v336
    %v338 = vmul.f32 %v335, %v337
    %v339 = vadd.f32 %v335, %v338
    %vm340 = vweird.f32 %v319
    %vm341 = vweird.f32 %v335
    %vm342 = vmor %vm340, %vm341
    %v343 = vsel %vm342, %v335, %v339
    %v344 = vand.u32 2147483647, %v319
    %vm345 = vcmp.eq.f32.partialorder %v344, 8.507059e+37
    %v346 = vand.u32 %v319, 2147483648
    %v347 = vor.u32 1.1754944e-38, %v346
    %v348 = vsel %vm345, %v347, %v343
    %v349 = vmul.f32 1.0, %v348
    %v350 = vtanh.pop %v310
    %v351 = vtanh.pop %v311
    %v354 = vrot.slane %v263, 7
    %v355 = vrot.slane %v264, 7
    %v358 = vmul.f32 %v334, %v354
    %v359 = vmul.f32 %v349, %v355
    %362 = vrot.lane.b32.xlu0 %v350, 64
    %v363 = vpop.permute.xlu0 %362
    %364 = vrot.lane.b32.xlu0 %v351, 64
    %v365 = vpop.permute.xlu0 %364
    %v368 = vmul.f32 %v334, %v363
    %v369 = vmul.f32 %v349, %v365
    %372 = vrot.lane.b32.xlu0 %v368, 32
    %v373 = vpop.permute.xlu0 %372
    %374 = vrot.lane.b32.xlu0 %v369, 32
    %v375 = vpop.permute.xlu0 %374
    %v378 = vadd.f32 %v358, %v373
    %v379 = vadd.f32 %v359, %v375
    %v380 = vtanh.pop %v378
    %v381 = vtanh.pop %v379
    %384 = vrot.lane.b32.xlu0 %v380, 64
    %v385 = vpop.permute.xlu0 %384
    %386 = vrot.lane.b32.xlu0 %v381, 64
    %v387 = vpop.permute.xlu0 %386
    %v390 = vmul.f32 %v334, %v385
    %v391 = vmul.f32 %v349, %v387
    %392 = vmatpush.msra.mxu0 0.0
    %393 = vmatpush.msra.mxu0 0.0
    %394 = vmatpush.msra.mxu0 0.0
    %395 = vmatpush.msra.mxu0 0.0
    %396 = vmatpush.msra.mxu0 0.0
    %397 = vmatpush.msra.mxu0 0.0
    %398 = vmatpush.msra.mxu0 0.0
    %399 = vmatpush.msra.mxu0 0.0
    %400 = vmatpush.msra.mxu0 0.0
    %401 = vmatpush.msra.mxu0 0.0
    %402 = vmatpush.msra.mxu0 0.0
    %403 = vmatpush.msra.mxu0 0.0
    %404 = vmatpush.msra.mxu0 %v125
    %405 = vmatpush.msra.mxu0 %v124
    %406 = vmatpush.msra.mxu0 %v123
    %407 = vmatpush.msra.mxu0 %v122
    %408 = vmatmul.f32.gmra.mxu0 %v284
    %v409 = vpop.f32.mrf.mxu0
    %v410 = vadd.f32 %v136, %v409
    %411 = vdwg.mxu0
    %412 = vmatpush.msra.mxu0 0.0
    %413 = vmatpush.msra.mxu0 0.0
    %414 = vmatpush.msra.mxu0 0.0
    %415 = vmatpush.msra.mxu0 0.0
    %416 = vmatpush.msra.mxu0 0.0
    %417 = vmatpush.msra.mxu0 0.0
    %418 = vmatpush.msra.mxu0 0.0
    %419 = vmatpush.msra.mxu0 0.0
    %420 = vmatpush.msra.mxu0 0.0
    %421 = vmatpush.msra.mxu0 0.0
    %422 = vmatpush.msra.mxu0 0.0
    %423 = vmatpush.msra.mxu0 0.0
    %424 = vmatpush.msra.mxu0 %v133
    %425 = vmatpush.msra.mxu0 %v132
    %426 = vmatpush.msra.mxu0 %v131
    %427 = vmatpush.msra.mxu0 %v130
    %428 = vmatmul.f32.gmra.mxu0 %v175
    %v429 = vpop.f32.mrf.mxu0
    %v430 = vadd.f32 0.0, %v429
    %431 = vdwg.mxu0
    %v432 = vadd.f32 %v410, %v430
    %v433 = vxor.u32 %v432, 2147483648
    %v434 = vmul.f32 %v433, 1.442695
    %v435 = vpow.pop %v434
    %v436 = vadd.f32 %v435, 1.0
    %v437 = vrcp.pop %v436
    %v438 = vmul.f32 %v436, %v437
    %v439 = vsub.f32 1.0, %v438
    %v440 = vmul.f32 %v437, %v439
    %v441 = vadd.f32 %v437, %v440
    %vm442 = vweird.f32 %v436
    %vm443 = vweird.f32 %v437
    %vm444 = vmor %vm442, %vm443
    %v445 = vsel %vm444, %v437, %v441
    %v446 = vand.u32 2147483647, %v436
    %vm447 = vcmp.eq.f32.partialorder %v446, 8.507059e+37
    %v448 = vand.u32 %v436, 2147483648
    %v449 = vor.u32 1.1754944e-38, %v448
    %v450 = vsel %vm447, %v449, %v445
    %v451 = vmul.f32 1.0, %v450
    %v452 = vtanh.pop %v432
    %v453 = vmul.f32 %v451, 0.0
    %455 = vrot.lane.b32.xlu0 %v452, 64
    %v456 = vpop.permute.xlu0 %455
    %v458 = vmul.f32 %v451, %v456
    %460 = vrot.lane.b32.xlu0 %v458, 32
    %v461 = vpop.permute.xlu0 %460
    %v463 = vadd.f32 %v453, %v461
    %v464 = vtanh.pop %v463
    %466 = vrot.lane.b32.xlu0 %v464, 64
    %v467 = vpop.permute.xlu0 %466
    %v469 = vmul.f32 %v451, %v467
    %471 = vrot.lane.b32.xlu0 %v469, 32
    %v472 = vpop.permute.xlu0 %471
    %vm474 = vcmask 254976
    %475 = vst.msk [vmem:[%s7] sm:$0x3] %vm474, %v472
    %v478 = vrot.slane %v390, 1
    %v479 = vsel %vm280, %v391, %v478
    %480 = vrot.lane.b32.xlu0 %v479, 32
    %v481 = vpop.permute.xlu0 %480
    %v482 = vsel %vm144, %v481, 0
    %484 = vmatpush.msra.mxu0 0.0
    %485 = vmatpush.msra.mxu0 0.0
    %486 = vmatpush.msra.mxu0 0.0
    %487 = vmatpush.msra.mxu0 0.0
    %488 = vmatpush.msra.mxu0 0.0
    %489 = vmatpush.msra.mxu0 0.0
    %490 = vmatpush.msra.mxu0 0.0
    %491 = vmatpush.msra.mxu0 0.0
    %492 = vmatpush.msra.mxu0 0.0
    %493 = vmatpush.msra.mxu0 0.0
    %494 = vmatpush.msra.mxu0 0.0
    %495 = vmatpush.msra.mxu0 0.0
    %496 = vmatpush.msra.mxu0 %v129
    %497 = vmatpush.msra.mxu0 %v128
    %498 = vmatpush.msra.mxu0 %v127
    %499 = vmatpush.msra.mxu0 %v126
    %500 = vmatmul.f32.gmra.mxu0 %v482
    %v501 = vpop.f32.mrf.mxu0
    %v502 = vadd.f32 0.0, %v501
    %503 = vdwg.mxu0
    %v505 = vrot.slane %v502, 6
    %v506 = vrot.slane %v502, 7
    %v509 = vadd.f32 %v169, %v505
    %v510 = vadd.f32 %v172, %v506
    %v511 = vxor.u32 %v509, 2147483648
    %v512 = vxor.u32 %v510, 2147483648
    %v513 = vmul.f32 %v511, 1.442695
    %v514 = vpow.pop %v513
    %v515 = vmul.f32 %v512, 1.442695
    %v516 = vpow.pop %v515
    %v517 = vadd.f32 %v514, 1.0
    %v518 = vadd.f32 %v516, 1.0
    %v519 = vrcp.pop %v517
    %v520 = vmul.f32 %v517, %v519
    %v521 = vsub.f32 1.0, %v520
    %v522 = vmul.f32 %v519, %v521
    %v523 = vadd.f32 %v519, %v522
    %vm524 = vweird.f32 %v517
    %vm525 = vweird.f32 %v519
    %vm526 = vmor %vm524, %vm525
    %v527 = vsel %vm526, %v519, %v523
    %v528 = vand.u32 2147483647, %v517
    %vm529 = vcmp.eq.f32.partialorder %v528, 8.507059e+37
    %v530 = vand.u32 %v517, 2147483648
    %v531 = vor.u32 1.1754944e-38, %v530
    %v532 = vsel %vm529, %v531, %v527
    %v533 = vmul.f32 1.0, %v532
    %v534 = vrcp.pop %v518
    %v535 = vmul.f32 %v518, %v534
    %v536 = vsub.f32 1.0, %v535
    %v537 = vmul.f32 %v534, %v536
    %v538 = vadd.f32 %v534, %v537
    %vm539 = vweird.f32 %v518
    %vm540 = vweird.f32 %v534
    %vm541 = vmor %vm539, %vm540
    %v542 = vsel %vm541, %v534, %v538
    %v543 = vand.u32 2147483647, %v518
    %vm544 = vcmp.eq.f32.partialorder %v543, 8.507059e+37
    %v545 = vand.u32 %v518, 2147483648
    %v546 = vor.u32 1.1754944e-38, %v545
    %v547 = vsel %vm544, %v546, %v542
    %v548 = vmul.f32 1.0, %v547
    %v549 = vtanh.pop %v509
    %v550 = vtanh.pop %v510
    %v553 = vrot.slane %v378, 7
    %v554 = vrot.slane %v379, 7
    %v557 = vmul.f32 %v533, %v553
    %v558 = vmul.f32 %v548, %v554
    %561 = vrot.lane.b32.xlu0 %v549, 64
    %v562 = vpop.permute.xlu0 %561
    %563 = vrot.lane.b32.xlu0 %v550, 64
    %v564 = vpop.permute.xlu0 %563
    %v567 = vmul.f32 %v533, %v562
    %v568 = vmul.f32 %v548, %v564
    %571 = vrot.lane.b32.xlu0 %v567, 32
    %v572 = vpop.permute.xlu0 %571
    %573 = vrot.lane.b32.xlu0 %v568, 32
    %v574 = vpop.permute.xlu0 %573
    %v577 = vadd.f32 %v557, %v572
    %v578 = vadd.f32 %v558, %v574
    %v579 = vtanh.pop %v577
    %v580 = vtanh.pop %v578
    %583 = vrot.lane.b32.xlu0 %v579, 64
    %v584 = vpop.permute.xlu0 %583
    %585 = vrot.lane.b32.xlu0 %v580, 64
    %v586 = vpop.permute.xlu0 %585
    %v589 = vmul.f32 %v533, %v584
    %v590 = vmul.f32 %v548, %v586
    %591 = vmatpush.msra.mxu0 0.0
    %592 = vmatpush.msra.mxu0 0.0
    %593 = vmatpush.msra.mxu0 0.0
    %594 = vmatpush.msra.mxu0 0.0
    %595 = vmatpush.msra.mxu0 0.0
    %596 = vmatpush.msra.mxu0 0.0
    %597 = vmatpush.msra.mxu0 0.0
    %598 = vmatpush.msra.mxu0 0.0
    %599 = vmatpush.msra.mxu0 0.0
    %600 = vmatpush.msra.mxu0 0.0
    %601 = vmatpush.msra.mxu0 0.0
    %602 = vmatpush.msra.mxu0 0.0
    %603 = vmatpush.msra.mxu0 %v125
    %604 = vmatpush.msra.mxu0 %v124
    %605 = vmatpush.msra.mxu0 %v123
    %606 = vmatpush.msra.mxu0 %v122
    %607 = vmatmul.f32.gmra.mxu0 %v482
    %v608 = vpop.f32.mrf.mxu0
    %v609 = vadd.f32 %v136, %v608
    %610 = vdwg.mxu0
    %v611 = vsel %vm144, %v472, 0
    %613 = vmatpush.msra.mxu0 0.0
    %614 = vmatpush.msra.mxu0 0.0
    %615 = vmatpush.msra.mxu0 0.0
    %616 = vmatpush.msra.mxu0 0.0
    %617 = vmatpush.msra.mxu0 0.0
    %618 = vmatpush.msra.mxu0 0.0
    %619 = vmatpush.msra.mxu0 0.0
    %620 = vmatpush.msra.mxu0 0.0
    %621 = vmatpush.msra.mxu0 0.0
    %622 = vmatpush.msra.mxu0 0.0
    %623 = vmatpush.msra.mxu0 0.0
    %624 = vmatpush.msra.mxu0 0.0
    %625 = vmatpush.msra.mxu0 %v133
    %626 = vmatpush.msra.mxu0 %v132
    %627 = vmatpush.msra.mxu0 %v131
    %628 = vmatpush.msra.mxu0 %v130
    %629 = vmatmul.f32.gmra.mxu0 %v611
    %v630 = vpop.f32.mrf.mxu0
    %v631 = vadd.f32 0.0, %v630
    %632 = vdwg.mxu0
    %v633 = vadd.f32 %v609, %v631
    %v634 = vxor.u32 %v633, 2147483648
    %v635 = vmul.f32 %v634, 1.442695
    %v636 = vpow.pop %v635
    %v637 = vadd.f32 %v636, 1.0
    %v638 = vrcp.pop %v637
    %v639 = vmul.f32 %v637, %v638
    %v640 = vsub.f32 1.0, %v639
    %v641 = vmul.f32 %v638, %v640
    %v642 = vadd.f32 %v638, %v641
    %vm643 = vweird.f32 %v637
    %vm644 = vweird.f32 %v638
    %vm645 = vmor %vm643, %vm644
    %v646 = vsel %vm645, %v638, %v642
    %v647 = vand.u32 2147483647, %v637
    %vm648 = vcmp.eq.f32.partialorder %v647, 8.507059e+37
    %v649 = vand.u32 %v637, 2147483648
    %v650 = vor.u32 1.1754944e-38, %v649
    %v651 = vsel %vm648, %v650, %v646
    %v652 = vmul.f32 1.0, %v651
    %v653 = vtanh.pop %v633
    %v654 = vmul.f32 %v652, %v463
    %656 = vrot.lane.b32.xlu0 %v653, 64
    %v657 = vpop.permute.xlu0 %656
    %v659 = vmul.f32 %v652, %v657
    %661 = vrot.lane.b32.xlu0 %v659, 32
    %v662 = vpop.permute.xlu0 %661
    %v664 = vadd.f32 %v654, %v662
    %v665 = vtanh.pop %v664
    %667 = vrot.lane.b32.xlu0 %v665, 64
    %v668 = vpop.permute.xlu0 %667
    %v670 = vmul.f32 %v652, %v668
    %672 = vrot.lane.b32.xlu0 %v670, 64
    %v673 = vpop.permute.xlu0 %672
    %vm675 = vcmask 517376
    %676 = vst.msk [vmem:[%s7] sm:$0x3] %vm675, %v673
    %v679 = vrot.slane %v589, 2
    %v680 = vrot.slane %v590, 1
    %v681 = vsel %vm280, %v680, %v679
    %682 = vrot.lane.b32.xlu0 %v681, 32
    %v683 = vpop.permute.xlu0 %682
    %v684 = vsel %vm144, %v683, 0
    %686 = vmatpush.msra.mxu0 0.0
    %687 = vmatpush.msra.mxu0 0.0
    %688 = vmatpush.msra.mxu0 0.0
    %689 = vmatpush.msra.mxu0 0.0
    %690 = vmatpush.msra.mxu0 0.0
    %691 = vmatpush.msra.mxu0 0.0
    %692 = vmatpush.msra.mxu0 0.0
    %693 = vmatpush.msra.mxu0 0.0
    %694 = vmatpush.msra.mxu0 0.0
    %695 = vmatpush.msra.mxu0 0.0
    %696 = vmatpush.msra.mxu0 0.0
    %697 = vmatpush.msra.mxu0 0.0
    %698 = vmatpush.msra.mxu0 %v129
    %699 = vmatpush.msra.mxu0 %v128
    %700 = vmatpush.msra.mxu0 %v127
    %701 = vmatpush.msra.mxu0 %v126
    %702 = vmatmul.f32.gmra.mxu0 %v684
    %v703 = vpop.f32.mrf.mxu0
    %v704 = vadd.f32 0.0, %v703
    %705 = vdwg.mxu0
    %v707 = vrot.slane %v704, 5
    %v708 = vrot.slane %v704, 6
    %v711 = vadd.f32 %v169, %v707
    %v712 = vadd.f32 %v172, %v708
    %v713 = vxor.u32 %v711, 2147483648
    %v714 = vxor.u32 %v712, 2147483648
    %v715 = vmul.f32 %v713, 1.442695
    %v716 = vpow.pop %v715
    %v717 = vmul.f32 %v714, 1.442695
    %v718 = vpow.pop %v717
    %v719 = vadd.f32 %v716, 1.0
    %v720 = vadd.f32 %v718, 1.0
    %v721 = vrcp.pop %v719
    %v722 = vmul.f32 %v719, %v721
    %v723 = vsub.f32 1.0, %v722
    %v724 = vmul.f32 %v721, %v723
    %v725 = vadd.f32 %v721, %v724
    %vm726 = vweird.f32 %v719
    %vm727 = vweird.f32 %v721
    %vm728 = vmor %vm726, %vm727
    %v729 = vsel %vm728, %v721, %v725
    %v730 = vand.u32 2147483647, %v719
    %vm731 = vcmp.eq.f32.partialorder %v730, 8.507059e+37
    %v732 = vand.u32 %v719, 2147483648
    %v733 = vor.u32 1.1754944e-38, %v732
    %v734 = vsel %vm731, %v733, %v729
    %v735 = vmul.f32 1.0, %v734
    %v736 = vrcp.pop %v720
    %v737 = vmul.f32 %v720, %v736
    %v738 = vsub.f32 1.0, %v737
    %v739 = vmul.f32 %v736, %v738
    %v740 = vadd.f32 %v736, %v739
    %vm741 = vweird.f32 %v720
    %vm742 = vweird.f32 %v736
    %vm743 = vmor %vm741, %vm742
    %v744 = vsel %vm743, %v736, %v740
    %v745 = vand.u32 2147483647, %v720
    %vm746 = vcmp.eq.f32.partialorder %v745, 8.507059e+37
    %v747 = vand.u32 %v720, 2147483648
    %v748 = vor.u32 1.1754944e-38, %v747
    %v749 = vsel %vm746, %v748, %v744
    %v750 = vmul.f32 1.0, %v749
    %v751 = vtanh.pop %v711
    %v752 = vtanh.pop %v712
    %v755 = vrot.slane %v577, 7
    %v756 = vrot.slane %v578, 7
    %v759 = vmul.f32 %v735, %v755
    %v760 = vmul.f32 %v750, %v756
    %763 = vrot.lane.b32.xlu0 %v751, 64
    %v764 = vpop.permute.xlu0 %763
    %765 = vrot.lane.b32.xlu0 %v752, 64
    %v766 = vpop.permute.xlu0 %765
    %v769 = vmul.f32 %v735, %v764
    %v770 = vmul.f32 %v750, %v766
    %773 = vrot.lane.b32.xlu0 %v769, 32
    %v774 = vpop.permute.xlu0 %773
    %775 = vrot.lane.b32.xlu0 %v770, 32
    %v776 = vpop.permute.xlu0 %775
    %v779 = vadd.f32 %v759, %v774
    %v780 = vadd.f32 %v760, %v776
    %v781 = vtanh.pop %v779
    %v782 = vtanh.pop %v780
    %785 = vrot.lane.b32.xlu0 %v781, 64
    %v786 = vpop.permute.xlu0 %785
    %787 = vrot.lane.b32.xlu0 %v782, 64
    %v788 = vpop.permute.xlu0 %787
    %v791 = vmul.f32 %v735, %v786
    %v792 = vmul.f32 %v750, %v788
    %793 = vmatpush.msra.mxu0 0.0
    %794 = vmatpush.msra.mxu0 0.0
    %795 = vmatpush.msra.mxu0 0.0
    %796 = vmatpush.msra.mxu0 0.0
    %797 = vmatpush.msra.mxu0 0.0
    %798 = vmatpush.msra.mxu0 0.0
    %799 = vmatpush.msra.mxu0 0.0
    %800 = vmatpush.msra.mxu0 0.0
    %801 = vmatpush.msra.mxu0 0.0
    %802 = vmatpush.msra.mxu0 0.0
    %803 = vmatpush.msra.mxu0 0.0
    %804 = vmatpush.msra.mxu0 0.0
    %805 = vmatpush.msra.mxu0 %v125
    %806 = vmatpush.msra.mxu0 %v124
    %807 = vmatpush.msra.mxu0 %v123
    %808 = vmatpush.msra.mxu0 %v122
    %809 = vmatmul.f32.gmra.mxu0 %v684
    %v810 = vpop.f32.mrf.mxu0
    %v811 = vadd.f32 %v136, %v810
    %812 = vdwg.mxu0
    %813 = vrot.lane.b32.xlu0 %v670, 32
    %v814 = vpop.permute.xlu0 %813
    %v815 = vsel %vm144, %v814, 0
    %817 = vmatpush.msra.mxu0 0.0
    %818 = vmatpush.msra.mxu0 0.0
    %819 = vmatpush.msra.mxu0 0.0
    %820 = vmatpush.msra.mxu0 0.0
    %821 = vmatpush.msra.mxu0 0.0
    %822 = vmatpush.msra.mxu0 0.0
    %823 = vmatpush.msra.mxu0 0.0
    %824 = vmatpush.msra.mxu0 0.0
    %825 = vmatpush.msra.mxu0 0.0
    %826 = vmatpush.msra.mxu0 0.0
    %827 = vmatpush.msra.mxu0 0.0
    %828 = vmatpush.msra.mxu0 0.0
    %829 = vmatpush.msra.mxu0 %v133
    %830 = vmatpush.msra.mxu0 %v132
    %831 = vmatpush.msra.mxu0 %v131
    %832 = vmatpush.msra.mxu0 %v130
    %833 = vmatmul.f32.gmra.mxu0 %v815
    %v834 = vpop.f32.mrf.mxu0
    %v835 = vadd.f32 0.0, %v834
    %836 = vdwg.mxu0
    %v837 = vadd.f32 %v811, %v835
    %v838 = vxor.u32 %v837, 2147483648
    %v839 = vmul.f32 %v838, 1.442695
    %v840 = vpow.pop %v839
    %v841 = vadd.f32 %v840, 1.0
    %v842 = vrcp.pop %v841
    %v843 = vmul.f32 %v841, %v842
    %v844 = vsub.f32 1.0, %v843
    %v845 = vmul.f32 %v842, %v844
    %v846 = vadd.f32 %v842, %v845
    %vm847 = vweird.f32 %v841
    %vm848 = vweird.f32 %v842
    %vm849 = vmor %vm847, %vm848
    %v850 = vsel %vm849, %v842, %v846
    %v851 = vand.u32 2147483647, %v841
    %vm852 = vcmp.eq.f32.partialorder %v851, 8.507059e+37
    %v853 = vand.u32 %v841, 2147483648
    %v854 = vor.u32 1.1754944e-38, %v853
    %v855 = vsel %vm852, %v854, %v850
    %v856 = vmul.f32 1.0, %v855
    %v857 = vtanh.pop %v837
    %v858 = vmul.f32 %v856, %v664
    %860 = vrot.lane.b32.xlu0 %v857, 64
    %v861 = vpop.permute.xlu0 %860
    %v863 = vmul.f32 %v856, %v861
    %865 = vrot.lane.b32.xlu0 %v863, 32
    %v866 = vpop.permute.xlu0 %865
    %v868 = vadd.f32 %v858, %v866
    %v869 = vtanh.pop %v868
    %871 = vrot.lane.b32.xlu0 %v869, 64
    %v872 = vpop.permute.xlu0 %871
    %v874 = vmul.f32 %v856, %v872
    %876 = vrot.lane.b32.xlu0 %v874, 96
    %v877 = vpop.permute.xlu0 %876
    %vm879 = vcmask 779776
    %880 = vst.msk [vmem:[%s7] sm:$0x3] %vm879, %v877
    %v883 = vrot.slane %v791, 3
    %v884 = vrot.slane %v792, 2
    %v885 = vsel %vm280, %v884, %v883
    %886 = vrot.lane.b32.xlu0 %v885, 32
    %v887 = vpop.permute.xlu0 %886
    %v888 = vsel %vm144, %v887, 0
    %890 = vmatpush.msra.mxu0 0.0
    %891 = vmatpush.msra.mxu0 0.0
    %892 = vmatpush.msra.mxu0 0.0
    %893 = vmatpush.msra.mxu0 0.0
    %894 = vmatpush.msra.mxu0 0.0
    %895 = vmatpush.msra.mxu0 0.0
    %896 = vmatpush.msra.mxu0 0.0
    %897 = vmatpush.msra.mxu0 0.0
    %898 = vmatpush.msra.mxu0 0.0
    %899 = vmatpush.msra.mxu0 0.0
    %900 = vmatpush.msra.mxu0 0.0
    %901 = vmatpush.msra.mxu0 0.0
    %902 = vmatpush.msra.mxu0 %v129
    %903 = vmatpush.msra.mxu0 %v128
    %904 = vmatpush.msra.mxu0 %v127
    %905 = vmatpush.msra.mxu0 %v126
    %906 = vmatmul.f32.gmra.mxu0 %v888
    %v907 = vpop.f32.mrf.mxu0
    %v908 = vadd.f32 0.0, %v907
    %909 = vdwg.mxu0
    %v911 = vrot.slane %v908, 4
    %v912 = vrot.slane %v908, 5
    %v915 = vadd.f32 %v169, %v911
    %v916 = vadd.f32 %v172, %v912
    %v917 = vxor.u32 %v915, 2147483648
    %v918 = vxor.u32 %v916, 2147483648
    %v919 = vmul.f32 %v917, 1.442695
    %v920 = vpow.pop %v919
    %v921 = vmul.f32 %v918, 1.442695
    %v922 = vpow.pop %v921
    %v923 = vadd.f32 %v920, 1.0
    %v924 = vadd.f32 %v922, 1.0
    %v925 = vrcp.pop %v923
    %v926 = vmul.f32 %v923, %v925
    %v927 = vsub.f32 1.0, %v926
    %v928 = vmul.f32 %v925, %v927
    %v929 = vadd.f32 %v925, %v928
    %vm930 = vweird.f32 %v923
    %vm931 = vweird.f32 %v925
    %vm932 = vmor %vm930, %vm931
    %v933 = vsel %vm932, %v925, %v929
    %v934 = vand.u32 2147483647, %v923
    %vm935 = vcmp.eq.f32.partialorder %v934, 8.507059e+37
    %v936 = vand.u32 %v923, 2147483648
    %v937 = vor.u32 1.1754944e-38, %v936
    %v938 = vsel %vm935, %v937, %v933
    %v939 = vmul.f32 1.0, %v938
    %v940 = vrcp.pop %v924
    %v941 = vmul.f32 %v924, %v940
    %v942 = vsub.f32 1.0, %v941
    %v943 = vmul.f32 %v940, %v942
    %v944 = vadd.f32 %v940, %v943
    %vm945 = vweird.f32 %v924
    %vm946 = vweird.f32 %v940
    %vm947 = vmor %vm945, %vm946
    %v948 = vsel %vm947, %v940, %v944
    %v949 = vand.u32 2147483647, %v924
    %vm950 = vcmp.eq.f32.partialorder %v949, 8.507059e+37
    %v951 = vand.u32 %v924, 2147483648
    %v952 = vor.u32 1.1754944e-38, %v951
    %v953 = vsel %vm950, %v952, %v948
    %v954 = vmul.f32 1.0, %v953
    %v955 = vtanh.pop %v915
    %v956 = vtanh.pop %v916
    %v959 = vrot.slane %v779, 7
    %v960 = vrot.slane %v780, 7
    %v963 = vmul.f32 %v939, %v959
    %v964 = vmul.f32 %v954, %v960
    %967 = vrot.lane.b32.xlu0 %v955, 64
    %v968 = vpop.permute.xlu0 %967
    %969 = vrot.lane.b32.xlu0 %v956, 64
    %v970 = vpop.permute.xlu0 %969
    %v973 = vmul.f32 %v939, %v968
    %v974 = vmul.f32 %v954, %v970
    %977 = vrot.lane.b32.xlu0 %v973, 32
    %v978 = vpop.permute.xlu0 %977
    %979 = vrot.lane.b32.xlu0 %v974, 32
    %v980 = vpop.permute.xlu0 %979
    %v983 = vadd.f32 %v963, %v978
    %v984 = vadd.f32 %v964, %v980
    %v985 = vtanh.pop %v983
    %v986 = vtanh.pop %v984
    %989 = vrot.lane.b32.xlu0 %v985, 64
    %v990 = vpop.permute.xlu0 %989
    %991 = vrot.lane.b32.xlu0 %v986, 64
    %v992 = vpop.permute.xlu0 %991
    %v995 = vmul.f32 %v939, %v990
    %v996 = vmul.f32 %v954, %v992
    %997 = vmatpush.msra.mxu0 0.0
    %998 = vmatpush.msra.mxu0 0.0
    %999 = vmatpush.msra.mxu0 0.0
    %1000 = vmatpush.msra.mxu0 0.0
    %1001 = vmatpush.msra.mxu0 0.0
    %1002 = vmatpush.msra.mxu0 0.0
    %1003 = vmatpush.msra.mxu0 0.0
    %1004 = vmatpush.msra.mxu0 0.0
    %1005 = vmatpush.msra.mxu0 0.0
    %1006 = vmatpush.msra.mxu0 0.0
    %1007 = vmatpush.msra.mxu0 0.0
    %1008 = vmatpush.msra.mxu0 0.0
    %1009 = vmatpush.msra.mxu0 %v125
    %1010 = vmatpush.msra.mxu0 %v124
    %1011 = vmatpush.msra.mxu0 %v123
    %1012 = vmatpush.msra.mxu0 %v122
    %1013 = vmatmul.f32.gmra.mxu0 %v888
    %v1014 = vpop.f32.mrf.mxu0
    %v1015 = vadd.f32 %v136, %v1014
    %1016 = vdwg.mxu0
    %1017 = vrot.lane.b32.xlu0 %v874, 32
    %v1018 = vpop.permute.xlu0 %1017
    %v1019 = vsel %vm144, %v1018, 0
    %1021 = vmatpush.msra.mxu0 0.0
    %1022 = vmatpush.msra.mxu0 0.0
    %1023 = vmatpush.msra.mxu0 0.0
    %1024 = vmatpush.msra.mxu0 0.0
    %1025 = vmatpush.msra.mxu0 0.0
    %1026 = vmatpush.msra.mxu0 0.0
    %1027 = vmatpush.msra.mxu0 0.0
    %1028 = vmatpush.msra.mxu0 0.0
    %1029 = vmatpush.msra.mxu0 0.0
    %1030 = vmatpush.msra.mxu0 0.0
    %1031 = vmatpush.msra.mxu0 0.0
    %1032 = vmatpush.msra.mxu0 0.0
    %1033 = vmatpush.msra.mxu0 %v133
    %1034 = vmatpush.msra.mxu0 %v132
    %1035 = vmatpush.msra.mxu0 %v131
    %1036 = vmatpush.msra.mxu0 %v130
    %1037 = vmatmul.f32.gmra.mxu0 %v1019
    %v1038 = vpop.f32.mrf.mxu0
    %v1039 = vadd.f32 0.0, %v1038
    %1040 = vdwg.mxu0
    %v1041 = vadd.f32 %v1015, %v1039
    %v1042 = vxor.u32 %v1041, 2147483648
    %v1043 = vmul.f32 %v1042, 1.442695
    %v1044 = vpow.pop %v1043
    %v1045 = vadd.f32 %v1044, 1.0
    %v1046 = vrcp.pop %v1045
    %v1047 = vmul.f32 %v1045, %v1046
    %v1048 = vsub.f32 1.0, %v1047
    %v1049 = vmul.f32 %v1046, %v1048
    %v1050 = vadd.f32 %v1046, %v1049
    %vm1051 = vweird.f32 %v1045
    %vm1052 = vweird.f32 %v1046
    %vm1053 = vmor %vm1051, %vm1052
    %v1054 = vsel %vm1053, %v1046, %v1050
    %v1055 = vand.u32 2147483647, %v1045
    %vm1056 = vcmp.eq.f32.partialorder %v1055, 8.507059e+37
    %v1057 = vand.u32 %v1045, 2147483648
    %v1058 = vor.u32 1.1754944e-38, %v1057
    %v1059 = vsel %vm1056, %v1058, %v1054
    %v1060 = vmul.f32 1.0, %v1059
    %v1061 = vtanh.pop %v1041
    %v1062 = vmul.f32 %v1060, %v868
    %1064 = vrot.lane.b32.xlu0 %v1061, 64
    %v1065 = vpop.permute.xlu0 %1064
    %v1067 = vmul.f32 %v1060, %v1065
    %1069 = vrot.lane.b32.xlu0 %v1067, 32
    %v1070 = vpop.permute.xlu0 %1069
    %v1072 = vadd.f32 %v1062, %v1070
    %v1073 = vtanh.pop %v1072
    %1075 = vrot.lane.b32.xlu0 %v1073, 64
    %v1076 = vpop.permute.xlu0 %1075
    %v1078 = vmul.f32 %v1060, %v1076
    %vm1079 = vcmask 1042176
    %1080 = vst.msk [vmem:[%s7] sm:$0x3] %vm1079, %v1078
    %v1083 = vrot.slane %v995, 4
    %v1084 = vrot.slane %v996, 3
    %v1085 = vsel %vm280, %v1084, %v1083
    %1086 = vrot.lane.b32.xlu0 %v1085, 32
    %v1087 = vpop.permute.xlu0 %1086
    %v1088 = vsel %vm144, %v1087, 0
    %1090 = vmatpush.msra.mxu0 0.0
    %1091 = vmatpush.msra.mxu0 0.0
    %1092 = vmatpush.msra.mxu0 0.0
    %1093 = vmatpush.msra.mxu0 0.0
    %1094 = vmatpush.msra.mxu0 0.0
    %1095 = vmatpush.msra.mxu0 0.0
    %1096 = vmatpush.msra.mxu0 0.0
    %1097 = vmatpush.msra.mxu0 0.0
    %1098 = vmatpush.msra.mxu0 0.0
    %1099 = vmatpush.msra.mxu0 0.0
    %1100 = vmatpush.msra.mxu0 0.0
    %1101 = vmatpush.msra.mxu0 0.0
    %1102 = vmatpush.msra.mxu0 %v129
    %1103 = vmatpush.msra.mxu0 %v128
    %1104 = vmatpush.msra.mxu0 %v127
    %1105 = vmatpush.msra.mxu0 %v126
    %1106 = vmatmul.f32.gmra.mxu0 %v1088
    %v1107 = vpop.f32.mrf.mxu0
    %v1108 = vadd.f32 0.0, %v1107
    %1109 = vdwg.mxu0
    %v1111 = vrot.slane %v1108, 3
    %v1112 = vrot.slane %v1108, 4
    %v1115 = vadd.f32 %v169, %v1111
    %v1116 = vadd.f32 %v172, %v1112
    %v1117 = vxor.u32 %v1115, 2147483648
    %v1118 = vxor.u32 %v1116, 2147483648
    %v1119 = vmul.f32 %v1117, 1.442695
    %v1120 = vpow.pop %v1119
    %v1121 = vmul.f32 %v1118, 1.442695
    %v1122 = vpow.pop %v1121
    %v1123 = vadd.f32 %v1120, 1.0
    %v1124 = vadd.f32 %v1122, 1.0
    %v1125 = vrcp.pop %v1123
    %v1126 = vmul.f32 %v1123, %v1125
    %v1127 = vsub.f32 1.0, %v1126
    %v1128 = vmul.f32 %v1125, %v1127
    %v1129 = vadd.f32 %v1125, %v1128
    %vm1130 = vweird.f32 %v1123
    %vm1131 = vweird.f32 %v1125
    %vm1132 = vmor %vm1130, %vm1131
    %v1133 = vsel %vm1132, %v1125, %v1129
    %v1134 = vand.u32 2147483647, %v1123
    %vm1135 = vcmp.eq.f32.partialorder %v1134, 8.507059e+37
    %v1136 = vand.u32 %v1123, 2147483648
    %v1137 = vor.u32 1.1754944e-38, %v1136
    %v1138 = vsel %vm1135, %v1137, %v1133
    %v1139 = vmul.f32 1.0, %v1138
    %v1140 = vrcp.pop %v1124
    %v1141 = vmul.f32 %v1124, %v1140
    %v1142 = vsub.f32 1.0, %v1141
    %v1143 = vmul.f32 %v1140, %v1142
    %v1144 = vadd.f32 %v1140, %v1143
    %vm1145 = vweird.f32 %v1124
    %vm1146 = vweird.f32 %v1140
    %vm1147 = vmor %vm1145, %vm1146
    %v1148 = vsel %vm1147, %v1140, %v1144
    %v1149 = vand.u32 2147483647, %v1124
    %vm1150 = vcmp.eq.f32.partialorder %v1149, 8.507059e+37
    %v1151 = vand.u32 %v1124, 2147483648
    %v1152 = vor.u32 1.1754944e-38, %v1151
    %v1153 = vsel %vm1150, %v1152, %v1148
    %v1154 = vmul.f32 1.0, %v1153
    %v1155 = vtanh.pop %v1115
    %v1156 = vtanh.pop %v1116
    %v1159 = vrot.slane %v983, 7
    %v1160 = vrot.slane %v984, 7
    %v1163 = vmul.f32 %v1139, %v1159
    %v1164 = vmul.f32 %v1154, %v1160
    %1167 = vrot.lane.b32.xlu0 %v1155, 64
    %v1168 = vpop.permute.xlu0 %1167
    %1169 = vrot.lane.b32.xlu0 %v1156, 64
    %v1170 = vpop.permute.xlu0 %1169
    %v1173 = vmul.f32 %v1139, %v1168
    %v1174 = vmul.f32 %v1154, %v1170
    %1177 = vrot.lane.b32.xlu0 %v1173, 32
    %v1178 = vpop.permute.xlu0 %1177
    %1179 = vrot.lane.b32.xlu0 %v1174, 32
    %v1180 = vpop.permute.xlu0 %1179
    %v1183 = vadd.f32 %v1163, %v1178
    %v1184 = vadd.f32 %v1164, %v1180
    %v1185 = vtanh.pop %v1183
    %v1186 = vtanh.pop %v1184
    %1189 = vrot.lane.b32.xlu0 %v1185, 64
    %v1190 = vpop.permute.xlu0 %1189
    %1191 = vrot.lane.b32.xlu0 %v1186, 64
    %v1192 = vpop.permute.xlu0 %1191
    %v1195 = vmul.f32 %v1139, %v1190
    %v1196 = vmul.f32 %v1154, %v1192
    %1197 = vmatpush.msra.mxu0 0.0
    %1198 = vmatpush.msra.mxu0 0.0
    %1199 = vmatpush.msra.mxu0 0.0
    %1200 = vmatpush.msra.mxu0 0.0
    %1201 = vmatpush.msra.mxu0 0.0
    %1202 = vmatpush.msra.mxu0 0.0
    %1203 = vmatpush.msra.mxu0 0.0
    %1204 = vmatpush.msra.mxu0 0.0
    %1205 = vmatpush.msra.mxu0 0.0
    %1206 = vmatpush.msra.mxu0 0.0
    %1207 = vmatpush.msra.mxu0 0.0
    %1208 = vmatpush.msra.mxu0 0.0
    %1209 = vmatpush.msra.mxu0 %v125
    %1210 = vmatpush.msra.mxu0 %v124
    %1211 = vmatpush.msra.mxu0 %v123
    %1212 = vmatpush.msra.mxu0 %v122
    %1213 = vmatmul.f32.gmra.mxu0 %v1088
    %v1214 = vpop.f32.mrf.mxu0
    %v1215 = vadd.f32 %v136, %v1214
    %1216 = vdwg.mxu0
    %1218 = vrot.lane.b32.xlu0 %v1078, 32
    %v1219 = vpop.permute.xlu0 %1218
    %v1220 = vsel %vm144, %v1219, 0
    %1222 = vmatpush.msra.mxu0 0.0
    %1223 = vmatpush.msra.mxu0 0.0
    %1224 = vmatpush.msra.mxu0 0.0
    %1225 = vmatpush.msra.mxu0 0.0
    %1226 = vmatpush.msra.mxu0 0.0
    %1227 = vmatpush.msra.mxu0 0.0
    %1228 = vmatpush.msra.mxu0 0.0
    %1229 = vmatpush.msra.mxu0 0.0
    %1230 = vmatpush.msra.mxu0 0.0
    %1231 = vmatpush.msra.mxu0 0.0
    %1232 = vmatpush.msra.mxu0 0.0
    %1233 = vmatpush.msra.mxu0 0.0
    %1234 = vmatpush.msra.mxu0 %v133
    %1235 = vmatpush.msra.mxu0 %v132
    %1236 = vmatpush.msra.mxu0 %v131
    %1237 = vmatpush.msra.mxu0 %v130
    %1238 = vmatmul.f32.gmra.mxu0 %v1220
    %v1239 = vpop.f32.mrf.mxu0
    %v1240 = vadd.f32 0.0, %v1239
    %1241 = vdwg.mxu0
    %v1242 = vadd.f32 %v1215, %v1240
    %v1243 = vxor.u32 %v1242, 2147483648
    %v1244 = vmul.f32 %v1243, 1.442695
    %v1245 = vpow.pop %v1244
    %v1246 = vadd.f32 %v1245, 1.0
    %v1247 = vrcp.pop %v1246
    %v1248 = vmul.f32 %v1246, %v1247
    %v1249 = vsub.f32 1.0, %v1248
    %v1250 = vmul.f32 %v1247, %v1249
    %v1251 = vadd.f32 %v1247, %v1250
    %vm1252 = vweird.f32 %v1246
    %vm1253 = vweird.f32 %v1247
    %vm1254 = vmor %vm1252, %vm1253
    %v1255 = vsel %vm1254, %v1247, %v1251
    %v1256 = vand.u32 2147483647, %v1246
    %vm1257 = vcmp.eq.f32.partialorder %v1256, 8.507059e+37
    %v1258 = vand.u32 %v1246, 2147483648
    %v1259 = vor.u32 1.1754944e-38, %v1258
    %v1260 = vsel %vm1257, %v1259, %v1255
    %v1261 = vmul.f32 1.0, %v1260
    %v1262 = vtanh.pop %v1242
    %v1263 = vmul.f32 %v1261, %v1072
    %1265 = vrot.lane.b32.xlu0 %v1262, 64
    %v1266 = vpop.permute.xlu0 %1265
    %v1268 = vmul.f32 %v1261, %v1266
    %1270 = vrot.lane.b32.xlu0 %v1268, 32
    %v1271 = vpop.permute.xlu0 %1270
    %v1273 = vadd.f32 %v1263, %v1271
    %v1274 = vtanh.pop %v1273
    %1276 = vrot.lane.b32.xlu0 %v1274, 64
    %v1277 = vpop.permute.xlu0 %1276
    %v1279 = vmul.f32 %v1261, %v1277
    %1281 = vrot.lane.b32.xlu0 %v1279, 32
    %v1282 = vpop.permute.xlu0 %1281
    %1284 = vst.msk [vmem:[%s7 + $0x2] sm:$0x3] %vm474, %v1282
    %v1287 = vrot.slane %v1195, 5
    %v1288 = vrot.slane %v1196, 4
    %v1289 = vsel %vm280, %v1288, %v1287
    %1290 = vrot.lane.b32.xlu0 %v1289, 32
    %v1291 = vpop.permute.xlu0 %1290
    %v1292 = vsel %vm144, %v1291, 0
    %1294 = vmatpush.msra.mxu0 0.0
    %1295 = vmatpush.msra.mxu0 0.0
    %1296 = vmatpush.msra.mxu0 0.0
    %1297 = vmatpush.msra.mxu0 0.0
    %1298 = vmatpush.msra.mxu0 0.0
    %1299 = vmatpush.msra.mxu0 0.0
    %1300 = vmatpush.msra.mxu0 0.0
    %1301 = vmatpush.msra.mxu0 0.0
    %1302 = vmatpush.msra.mxu0 0.0
    %1303 = vmatpush.msra.mxu0 0.0
    %1304 = vmatpush.msra.mxu0 0.0
    %1305 = vmatpush.msra.mxu0 0.0
    %1306 = vmatpush.msra.mxu0 %v129
    %1307 = vmatpush.msra.mxu0 %v128
    %1308 = vmatpush.msra.mxu0 %v127
    %1309 = vmatpush.msra.mxu0 %v126
    %1310 = vmatmul.f32.gmra.mxu0 %v1292
    %v1311 = vpop.f32.mrf.mxu0
    %v1312 = vadd.f32 0.0, %v1311
    %1313 = vdwg.mxu0
    %v1315 = vrot.slane %v1312, 2
    %v1316 = vrot.slane %v1312, 3
    %v1319 = vadd.f32 %v169, %v1315
    %v1320 = vadd.f32 %v172, %v1316
    %v1321 = vxor.u32 %v1319, 2147483648
    %v1322 = vxor.u32 %v1320, 2147483648
    %v1323 = vmul.f32 %v1321, 1.442695
    %v1324 = vpow.pop %v1323
    %v1325 = vmul.f32 %v1322, 1.442695
    %v1326 = vpow.pop %v1325
    %v1327 = vadd.f32 %v1324, 1.0
    %v1328 = vadd.f32 %v1326, 1.0
    %v1329 = vrcp.pop %v1327
    %v1330 = vmul.f32 %v1327, %v1329
    %v1331 = vsub.f32 1.0, %v1330
    %v1332 = vmul.f32 %v1329, %v1331
    %v1333 = vadd.f32 %v1329, %v1332
    %vm1334 = vweird.f32 %v1327
    %vm1335 = vweird.f32 %v1329
    %vm1336 = vmor %vm1334, %vm1335
    %v1337 = vsel %vm1336, %v1329, %v1333
    %v1338 = vand.u32 2147483647, %v1327
    %vm1339 = vcmp.eq.f32.partialorder %v1338, 8.507059e+37
    %v1340 = vand.u32 %v1327, 2147483648
    %v1341 = vor.u32 1.1754944e-38, %v1340
    %v1342 = vsel %vm1339, %v1341, %v1337
    %v1343 = vmul.f32 1.0, %v1342
    %v1344 = vrcp.pop %v1328
    %v1345 = vmul.f32 %v1328, %v1344
    %v1346 = vsub.f32 1.0, %v1345
    %v1347 = vmul.f32 %v1344, %v1346
    %v1348 = vadd.f32 %v1344, %v1347
    %vm1349 = vweird.f32 %v1328
    %vm1350 = vweird.f32 %v1344
    %vm1351 = vmor %vm1349, %vm1350
    %v1352 = vsel %vm1351, %v1344, %v1348
    %v1353 = vand.u32 2147483647, %v1328
    %vm1354 = vcmp.eq.f32.partialorder %v1353, 8.507059e+37
    %v1355 = vand.u32 %v1328, 2147483648
    %v1356 = vor.u32 1.1754944e-38, %v1355
    %v1357 = vsel %vm1354, %v1356, %v1352
    %v1358 = vmul.f32 1.0, %v1357
    %v1359 = vtanh.pop %v1319
    %v1360 = vtanh.pop %v1320
    %v1363 = vrot.slane %v1183, 7
    %v1364 = vrot.slane %v1184, 7
    %v1367 = vmul.f32 %v1343, %v1363
    %v1368 = vmul.f32 %v1358, %v1364
    %1371 = vrot.lane.b32.xlu0 %v1359, 64
    %v1372 = vpop.permute.xlu0 %1371
    %1373 = vrot.lane.b32.xlu0 %v1360, 64
    %v1374 = vpop.permute.xlu0 %1373
    %v1377 = vmul.f32 %v1343, %v1372
    %v1378 = vmul.f32 %v1358, %v1374
    %1381 = vrot.lane.b32.xlu0 %v1377, 32
    %v1382 = vpop.permute.xlu0 %1381
    %1383 = vrot.lane.b32.xlu0 %v1378, 32
    %v1384 = vpop.permute.xlu0 %1383
    %v1387 = vadd.f32 %v1367, %v1382
    %v1388 = vadd.f32 %v1368, %v1384
    %v1389 = vtanh.pop %v1387
    %v1390 = vtanh.pop %v1388
    %1393 = vrot.lane.b32.xlu0 %v1389, 64
    %v1394 = vpop.permute.xlu0 %1393
    %1395 = vrot.lane.b32.xlu0 %v1390, 64
    %v1396 = vpop.permute.xlu0 %1395
    %v1399 = vmul.f32 %v1343, %v1394
    %v1400 = vmul.f32 %v1358, %v1396
    %1401 = vmatpush.msra.mxu0 0.0
    %1402 = vmatpush.msra.mxu0 0.0
    %1403 = vmatpush.msra.mxu0 0.0
    %1404 = vmatpush.msra.mxu0 0.0
    %1405 = vmatpush.msra.mxu0 0.0
    %1406 = vmatpush.msra.mxu0 0.0
    %1407 = vmatpush.msra.mxu0 0.0
    %1408 = vmatpush.msra.mxu0 0.0
    %1409 = vmatpush.msra.mxu0 0.0
    %1410 = vmatpush.msra.mxu0 0.0
    %1411 = vmatpush.msra.mxu0 0.0
    %1412 = vmatpush.msra.mxu0 0.0
    %1413 = vmatpush.msra.mxu0 %v125
    %1414 = vmatpush.msra.mxu0 %v124
    %1415 = vmatpush.msra.mxu0 %v123
    %1416 = vmatpush.msra.mxu0 %v122
    %1417 = vmatmul.f32.gmra.mxu0 %v1292
    %v1418 = vpop.f32.mrf.mxu0
    %v1419 = vadd.f32 %v136, %v1418
    %1420 = vdwg.mxu0
    %v1421 = vsel %vm144, %v1282, 0
    %1423 = vmatpush.msra.mxu0 0.0
    %1424 = vmatpush.msra.mxu0 0.0
    %1425 = vmatpush.msra.mxu0 0.0
    %1426 = vmatpush.msra.mxu0 0.0
    %1427 = vmatpush.msra.mxu0 0.0
    %1428 = vmatpush.msra.mxu0 0.0
    %1429 = vmatpush.msra.mxu0 0.0
    %1430 = vmatpush.msra.mxu0 0.0
    %1431 = vmatpush.msra.mxu0 0.0
    %1432 = vmatpush.msra.mxu0 0.0
    %1433 = vmatpush.msra.mxu0 0.0
    %1434 = vmatpush.msra.mxu0 0.0
    %1435 = vmatpush.msra.mxu0 %v133
    %1436 = vmatpush.msra.mxu0 %v132
    %1437 = vmatpush.msra.mxu0 %v131
    %1438 = vmatpush.msra.mxu0 %v130
    %1439 = vmatmul.f32.gmra.mxu0 %v1421
    %v1440 = vpop.f32.mrf.mxu0
    %v1441 = vadd.f32 0.0, %v1440
    %1442 = vdwg.mxu0
    %v1443 = vadd.f32 %v1419, %v1441
    %v1444 = vxor.u32 %v1443, 2147483648
    %v1445 = vmul.f32 %v1444, 1.442695
    %v1446 = vpow.pop %v1445
    %v1447 = vadd.f32 %v1446, 1.0
    %v1448 = vrcp.pop %v1447
    %v1449 = vmul.f32 %v1447, %v1448
    %v1450 = vsub.f32 1.0, %v1449
    %v1451 = vmul.f32 %v1448, %v1450
    %v1452 = vadd.f32 %v1448, %v1451
    %vm1453 = vweird.f32 %v1447
    %vm1454 = vweird.f32 %v1448
    %vm1455 = vmor %vm1453, %vm1454
    %v1456 = vsel %vm1455, %v1448, %v1452
    %v1457 = vand.u32 2147483647, %v1447
    %vm1458 = vcmp.eq.f32.partialorder %v1457, 8.507059e+37
    %v1459 = vand.u32 %v1447, 2147483648
    %v1460 = vor.u32 1.1754944e-38, %v1459
    %v1461 = vsel %vm1458, %v1460, %v1456
    %v1462 = vmul.f32 1.0, %v1461
    %v1463 = vtanh.pop %v1443
    %v1464 = vmul.f32 %v1462, %v1273
    %1466 = vrot.lane.b32.xlu0 %v1463, 64
    %v1467 = vpop.permute.xlu0 %1466
    %v1469 = vmul.f32 %v1462, %v1467
    %1471 = vrot.lane.b32.xlu0 %v1469, 32
    %v1472 = vpop.permute.xlu0 %1471
    %v1474 = vadd.f32 %v1464, %v1472
    %v1475 = vtanh.pop %v1474
    %1477 = vrot.lane.b32.xlu0 %v1475, 64
    %v1478 = vpop.permute.xlu0 %1477
    %v1480 = vmul.f32 %v1462, %v1478
    %1482 = vrot.lane.b32.xlu0 %v1480, 64
    %v1483 = vpop.permute.xlu0 %1482
    %1485 = vst.msk [vmem:[%s7 + $0x2] sm:$0x3] %vm675, %v1483
    %v1488 = vrot.slane %v1399, 6
    %v1489 = vrot.slane %v1400, 5
    %v1490 = vsel %vm280, %v1489, %v1488
    %1491 = vrot.lane.b32.xlu0 %v1490, 32
    %v1492 = vpop.permute.xlu0 %1491
    %v1493 = vsel %vm144, %v1492, 0
    %1495 = vmatpush.msra.mxu0 0.0
    %1496 = vmatpush.msra.mxu0 0.0
    %1497 = vmatpush.msra.mxu0 0.0
    %1498 = vmatpush.msra.mxu0 0.0
    %1499 = vmatpush.msra.mxu0 0.0
    %1500 = vmatpush.msra.mxu0 0.0
    %1501 = vmatpush.msra.mxu0 0.0
    %1502 = vmatpush.msra.mxu0 0.0
    %1503 = vmatpush.msra.mxu0 0.0
    %1504 = vmatpush.msra.mxu0 0.0
    %1505 = vmatpush.msra.mxu0 0.0
    %1506 = vmatpush.msra.mxu0 0.0
    %1507 = vmatpush.msra.mxu0 %v129
    %1508 = vmatpush.msra.mxu0 %v128
    %1509 = vmatpush.msra.mxu0 %v127
    %1510 = vmatpush.msra.mxu0 %v126
    %1511 = vmatmul.f32.gmra.mxu0 %v1493
    %v1512 = vpop.f32.mrf.mxu0
    %v1513 = vadd.f32 0.0, %v1512
    %1514 = vdwg.mxu0
    %v1516 = vrot.slane %v1513, 1
    %v1517 = vrot.slane %v1513, 2
    %v1520 = vadd.f32 %v169, %v1516
    %v1521 = vadd.f32 %v172, %v1517
    %v1522 = vxor.u32 %v1520, 2147483648
    %v1523 = vxor.u32 %v1521, 2147483648
    %v1524 = vmul.f32 %v1522, 1.442695
    %v1525 = vpow.pop %v1524
    %v1526 = vmul.f32 %v1523, 1.442695
    %v1527 = vpow.pop %v1526
    %v1528 = vadd.f32 %v1525, 1.0
    %v1529 = vadd.f32 %v1527, 1.0
    %v1530 = vrcp.pop %v1528
    %v1531 = vmul.f32 %v1528, %v1530
    %v1532 = vsub.f32 1.0, %v1531
    %v1533 = vmul.f32 %v1530, %v1532
    %v1534 = vadd.f32 %v1530, %v1533
    %vm1535 = vweird.f32 %v1528
    %vm1536 = vweird.f32 %v1530
    %vm1537 = vmor %vm1535, %vm1536
    %v1538 = vsel %vm1537, %v1530, %v1534
    %v1539 = vand.u32 2147483647, %v1528
    %vm1540 = vcmp.eq.f32.partialorder %v1539, 8.507059e+37
    %v1541 = vand.u32 %v1528, 2147483648
    %v1542 = vor.u32 1.1754944e-38, %v1541
    %v1543 = vsel %vm1540, %v1542, %v1538
    %v1544 = vmul.f32 1.0, %v1543
    %v1545 = vrcp.pop %v1529
    %v1546 = vmul.f32 %v1529, %v1545
    %v1547 = vsub.f32 1.0, %v1546
    %v1548 = vmul.f32 %v1545, %v1547
    %v1549 = vadd.f32 %v1545, %v1548
    %vm1550 = vweird.f32 %v1529
    %vm1551 = vweird.f32 %v1545
    %vm1552 = vmor %vm1550, %vm1551
    %v1553 = vsel %vm1552, %v1545, %v1549
    %v1554 = vand.u32 2147483647, %v1529
    %vm1555 = vcmp.eq.f32.partialorder %v1554, 8.507059e+37
    %v1556 = vand.u32 %v1529, 2147483648
    %v1557 = vor.u32 1.1754944e-38, %v1556
    %v1558 = vsel %vm1555, %v1557, %v1553
    %v1559 = vmul.f32 1.0, %v1558
    %v1560 = vtanh.pop %v1520
    %v1561 = vtanh.pop %v1521
    %v1564 = vrot.slane %v1387, 7
    %v1565 = vrot.slane %v1388, 7
    %v1568 = vmul.f32 %v1544, %v1564
    %v1569 = vmul.f32 %v1559, %v1565
    %1572 = vrot.lane.b32.xlu0 %v1560, 64
    %v1573 = vpop.permute.xlu0 %1572
    %1574 = vrot.lane.b32.xlu0 %v1561, 64
    %v1575 = vpop.permute.xlu0 %1574
    %v1578 = vmul.f32 %v1544, %v1573
    %v1579 = vmul.f32 %v1559, %v1575
    %1582 = vrot.lane.b32.xlu0 %v1578, 32
    %v1583 = vpop.permute.xlu0 %1582
    %1584 = vrot.lane.b32.xlu0 %v1579, 32
    %v1585 = vpop.permute.xlu0 %1584
    %v1588 = vadd.f32 %v1568, %v1583
    %v1589 = vadd.f32 %v1569, %v1585
    %v1590 = vtanh.pop %v1588
    %v1591 = vtanh.pop %v1589
    %1594 = vrot.lane.b32.xlu0 %v1590, 64
    %v1595 = vpop.permute.xlu0 %1594
    %1596 = vrot.lane.b32.xlu0 %v1591, 64
    %v1597 = vpop.permute.xlu0 %1596
    %v1600 = vmul.f32 %v1544, %v1595
    %v1601 = vmul.f32 %v1559, %v1597
    %1602 = vmatpush.msra.mxu0 0.0
    %1603 = vmatpush.msra.mxu0 0.0
    %1604 = vmatpush.msra.mxu0 0.0
    %1605 = vmatpush.msra.mxu0 0.0
    %1606 = vmatpush.msra.mxu0 0.0
    %1607 = vmatpush.msra.mxu0 0.0
    %1608 = vmatpush.msra.mxu0 0.0
    %1609 = vmatpush.msra.mxu0 0.0
    %1610 = vmatpush.msra.mxu0 0.0
    %1611 = vmatpush.msra.mxu0 0.0
    %1612 = vmatpush.msra.mxu0 0.0
    %1613 = vmatpush.msra.mxu0 0.0
    %1614 = vmatpush.msra.mxu0 %v125
    %1615 = vmatpush.msra.mxu0 %v124
    %1616 = vmatpush.msra.mxu0 %v123
    %1617 = vmatpush.msra.mxu0 %v122
    %1618 = vmatmul.f32.gmra.mxu0 %v1493
    %v1619 = vpop.f32.mrf.mxu0
    %v1620 = vadd.f32 %v136, %v1619
    %1621 = vdwg.mxu0
    %1622 = vrot.lane.b32.xlu0 %v1480, 32
    %v1623 = vpop.permute.xlu0 %1622
    %v1624 = vsel %vm144, %v1623, 0
    %1626 = vmatpush.msra.mxu0 0.0
    %1627 = vmatpush.msra.mxu0 0.0
    %1628 = vmatpush.msra.mxu0 0.0
    %1629 = vmatpush.msra.mxu0 0.0
    %1630 = vmatpush.msra.mxu0 0.0
    %1631 = vmatpush.msra.mxu0 0.0
    %1632 = vmatpush.msra.mxu0 0.0
    %1633 = vmatpush.msra.mxu0 0.0
    %1634 = vmatpush.msra.mxu0 0.0
    %1635 = vmatpush.msra.mxu0 0.0
    %1636 = vmatpush.msra.mxu0 0.0
    %1637 = vmatpush.msra.mxu0 0.0
    %1638 = vmatpush.msra.mxu0 %v133
    %1639 = vmatpush.msra.mxu0 %v132
    %1640 = vmatpush.msra.mxu0 %v131
    %1641 = vmatpush.msra.mxu0 %v130
    %1642 = vmatmul.f32.gmra.mxu0 %v1624
    %v1643 = vpop.f32.mrf.mxu0
    %v1644 = vadd.f32 0.0, %v1643
    %1645 = vdwg.mxu0
    %v1646 = vadd.f32 %v1620, %v1644
    %v1647 = vxor.u32 %v1646, 2147483648
    %v1648 = vmul.f32 %v1647, 1.442695
    %v1649 = vpow.pop %v1648
    %v1650 = vadd.f32 %v1649, 1.0
    %v1651 = vrcp.pop %v1650
    %v1652 = vmul.f32 %v1650, %v1651
    %v1653 = vsub.f32 1.0, %v1652
    %v1654 = vmul.f32 %v1651, %v1653
    %v1655 = vadd.f32 %v1651, %v1654
    %vm1656 = vweird.f32 %v1650
    %vm1657 = vweird.f32 %v1651
    %vm1658 = vmor %vm1656, %vm1657
    %v1659 = vsel %vm1658, %v1651, %v1655
    %v1660 = vand.u32 2147483647, %v1650
    %vm1661 = vcmp.eq.f32.partialorder %v1660, 8.507059e+37
    %v1662 = vand.u32 %v1650, 2147483648
    %v1663 = vor.u32 1.1754944e-38, %v1662
    %v1664 = vsel %vm1661, %v1663, %v1659
    %v1665 = vmul.f32 1.0, %v1664
    %v1666 = vtanh.pop %v1646
    %v1667 = vmul.f32 %v1665, %v1474
    %1669 = vrot.lane.b32.xlu0 %v1666, 64
    %v1670 = vpop.permute.xlu0 %1669
    %v1672 = vmul.f32 %v1665, %v1670
    %1674 = vrot.lane.b32.xlu0 %v1672, 32
    %v1675 = vpop.permute.xlu0 %1674
    %v1677 = vadd.f32 %v1667, %v1675
    %v1678 = vtanh.pop %v1677
    %1680 = vrot.lane.b32.xlu0 %v1678, 64
    %v1681 = vpop.permute.xlu0 %1680
    %v1683 = vmul.f32 %v1665, %v1681
    %1685 = vrot.lane.b32.xlu0 %v1683, 96
    %v1686 = vpop.permute.xlu0 %1685
    %1688 = vst.msk [vmem:[%s7 + $0x2] sm:$0x3] %vm879, %v1686
    %v1691 = vrot.slane %v1600, 7
    %v1692 = vrot.slane %v1601, 6
    %v1693 = vsel %vm280, %v1692, %v1691
    %1694 = vrot.lane.b32.xlu0 %v1693, 32
    %v1695 = vpop.permute.xlu0 %1694
    %v1696 = vsel %vm144, %v1695, 0
    %1698 = vmatpush.msra.mxu0 0.0
    %1699 = vmatpush.msra.mxu0 0.0
    %1700 = vmatpush.msra.mxu0 0.0
    %1701 = vmatpush.msra.mxu0 0.0
    %1702 = vmatpush.msra.mxu0 0.0
    %1703 = vmatpush.msra.mxu0 0.0
    %1704 = vmatpush.msra.mxu0 0.0
    %1705 = vmatpush.msra.mxu0 0.0
    %1706 = vmatpush.msra.mxu0 0.0
    %1707 = vmatpush.msra.mxu0 0.0
    %1708 = vmatpush.msra.mxu0 0.0
    %1709 = vmatpush.msra.mxu0 0.0
    %1710 = vmatpush.msra.mxu0 %v125
    %1711 = vmatpush.msra.mxu0 %v124
    %1712 = vmatpush.msra.mxu0 %v123
    %1713 = vmatpush.msra.mxu0 %v122
    %1714 = vmatmul.f32.gmra.mxu0 %v1696
    %v1715 = vpop.f32.mrf.mxu0
    %v1716 = vadd.f32 %v136, %v1715
    %1717 = vdwg.mxu0
    %1718 = vrot.lane.b32.xlu0 %v1683, 32
    %v1719 = vpop.permute.xlu0 %1718
    %v1720 = vsel %vm144, %v1719, 0
    %1722 = vmatpush.msra.mxu0 0.0
    %1723 = vmatpush.msra.mxu0 0.0
    %1724 = vmatpush.msra.mxu0 0.0
    %1725 = vmatpush.msra.mxu0 0.0
    %1726 = vmatpush.msra.mxu0 0.0
    %1727 = vmatpush.msra.mxu0 0.0
    %1728 = vmatpush.msra.mxu0 0.0
    %1729 = vmatpush.msra.mxu0 0.0
    %1730 = vmatpush.msra.mxu0 0.0
    %1731 = vmatpush.msra.mxu0 0.0
    %1732 = vmatpush.msra.mxu0 0.0
    %1733 = vmatpush.msra.mxu0 0.0
    %1734 = vmatpush.msra.mxu0 %v133
    %1735 = vmatpush.msra.mxu0 %v132
    %1736 = vmatpush.msra.mxu0 %v131
    %1737 = vmatpush.msra.mxu0 %v130
    %1738 = vmatmul.f32.gmra.mxu0 %v1720
    %v1739 = vpop.f32.mrf.mxu0
    %v1740 = vadd.f32 0.0, %v1739
    %1741 = vdwg.mxu0
    %v1742 = vadd.f32 %v1716, %v1740
    %v1743 = vxor.u32 %v1742, 2147483648
    %v1744 = vmul.f32 %v1743, 1.442695
    %v1745 = vpow.pop %v1744
    %v1746 = vadd.f32 %v1745, 1.0
    %v1747 = vrcp.pop %v1746
    %v1748 = vmul.f32 %v1746, %v1747
    %v1749 = vsub.f32 1.0, %v1748
    %v1750 = vmul.f32 %v1747, %v1749
    %v1751 = vadd.f32 %v1747, %v1750
    %vm1752 = vweird.f32 %v1746
    %vm1753 = vweird.f32 %v1747
    %vm1754 = vmor %vm1752, %vm1753
    %v1755 = vsel %vm1754, %v1747, %v1751
    %v1756 = vand.u32 2147483647, %v1746
    %vm1757 = vcmp.eq.f32.partialorder %v1756, 8.507059e+37
    %v1758 = vand.u32 %v1746, 2147483648
    %v1759 = vor.u32 1.1754944e-38, %v1758
    %v1760 = vsel %vm1757, %v1759, %v1755
    %v1761 = vmul.f32 1.0, %v1760
    %v1762 = vtanh.pop %v1742
    %v1763 = vmul.f32 %v1761, %v1677
    %1765 = vrot.lane.b32.xlu0 %v1762, 64
    %v1766 = vpop.permute.xlu0 %1765
    %v1768 = vmul.f32 %v1761, %v1766
    %1770 = vrot.lane.b32.xlu0 %v1768, 32
    %v1771 = vpop.permute.xlu0 %1770
    %v1773 = vadd.f32 %v1763, %v1771
    %v1774 = vtanh.pop %v1773
    %1776 = vrot.lane.b32.xlu0 %v1774, 64
    %v1777 = vpop.permute.xlu0 %1776
    %v1779 = vmul.f32 %v1761, %v1777
    %1780 = vst.msk [vmem:[%s7 + $0x2] sm:$0x3] %vm1079, %v1779
    // Predicated region
    $region54: #{temporal_converge_lstm_forward.1} parent=1 // pred_check
      _
    $region55: #{temporal_converge_lstm_forward.1} parent=1 // pred_check_branch
      %1782 = sbr.rel (0) target = $region57
    $region56: #{temporal_converge_lstm_forward.1} parent=1 // pred_region
      _
    $region57: #{temporal_converge_lstm_forward.1} parent=1 // pred_fallthru
      _
    // Predicated region
    $region58: #{temporal_converge_lstm_forward.1} parent=1 // pred_check
      _
    $region59: #{temporal_converge_lstm_forward.1} parent=1 // pred_check_branch
      %1784 = sbr.rel (0) target = $region61
    $region60: #{temporal_converge_lstm_forward.1} parent=1 // pred_region
      _
    $region61: #{temporal_converge_lstm_forward.1} parent=1 // pred_fallthru
      _
    %1785 = vsyncpa [#allocation3], 1
    %1786 = vsyncpa [#allocation5], 1
    %1787 = vsyncpa [#allocation8], 1
    %1788 = vsyncpa [#allocation11], 1

</llo_original>
